<compile_context>
chip_gen: v7x
topology: tpu7x:2x2x1
jax: 0.10.0
libtpu: 0.0.40
codegen_flags: <defaults>
</compile_context>

<pallas_src>
import functools

import jax
import jax.numpy as jnp
import numpy as np
from jax.experimental import pallas as pl
from jax.experimental.pallas import tpu as pltpu

EPS = 1e-5


def _basic_block_kernel(x_ref, a1_ref, a2_ref, p_ref, pt_ref,
                        g1_ref, b1_ref, g2_ref, b2_ref, gs_ref, bs_ref,
                        out_ref, *, h_img, inv_m):
    """x_ref: (N*H, W*Cin) bf16; out_ref: (N*H, W*Cm) f32 (lane-dense)."""
    nh, wc = out_ref.shape

    # Per-image vertical-boundary masks (VPU, built once, shared by both convs).
    row = jax.lax.broadcasted_iota(jnp.int32, (nh, 1), 0)
    h = row % h_img
    mask_up = (h != 0).astype(jnp.float32)            # zero at top row of image
    mask_dn = (h != h_img - 1).astype(jnp.float32)    # zero at bottom row

    def shift_add(up, mid, dn):
        # out[r] = up[r-1] + mid[r] + dn[r+1], zero across per-image H
        # boundaries. pltpu.roll goes to the XLU and the mask-mul to the VPU,
        # both off the MXU critical path (replaces the old O((N*H)^2) f32
        # shift matmuls).
        up_s = mask_up * pltpu.roll(up, shift=1, axis=0)
        dn_s = mask_dn * pltpu.roll(dn, shift=nh - 1, axis=0)   # == shift -1
        return mid + up_s + dn_s

    def bn(y, g_ref, b_ref):
        # Training-mode BatchNorm folded to y*scale + shift (batch stats over
        # (N,H,W), biased variance). Stats fold / scale tiling across the W
        # lane groups use one small f32 matmul each (2 MXU pushes per BN).
        srow = jnp.sum(y, axis=0, keepdims=True)         # (1, W*Cm)
        sqrow = jnp.sum(y * y, axis=0, keepdims=True)    # (1, W*Cm)
        sel = jax.lax.broadcasted_iota(jnp.int32, (2, wc), 0) == 0
        s = jnp.where(sel, srow, sqrow)                  # (2, W*Cm), VPU select
        folded = jnp.dot(s, p_ref[...],
                         preferred_element_type=jnp.float32)        # (2, Cm)
        mean = folded[0:1, :] * inv_m
        # TODO(synk): single-pass E[x^2]-mean^2 cancels when |mean| >> std;
        # switch to a two-pass / Welford variance if this is scaled up.
        var = jnp.maximum(folded[1:2, :] * inv_m - mean * mean, 0.0)
        scale = g_ref[...] * jax.lax.rsqrt(var + EPS)                # (1, Cm)
        shift = b_ref[...] - mean * scale
        cm = scale.shape[1]
        sel2 = jax.lax.broadcasted_iota(jnp.int32, (2, cm), 0) == 0
        ss = jnp.where(sel2, scale, shift)               # (2, Cm)
        tiled = jnp.dot(ss, pt_ref[...],
                        preferred_element_type=jnp.float32)          # (2, W*Cm)
        return y * tiled[0:1, :] + tiled[1:2, :]

    x_bf = x_ref[...]            # (N*H, W*Cin) bf16; feeds conv1 AND shortcut

    # conv1: three vertical taps AND the 1x1 shortcut fused into ONE bf16 MXU
    # dot; column groups [up | mid | dn | shortcut] are lane-aligned (128).
    t1 = jnp.dot(x_bf, a1_ref[...], preferred_element_type=jnp.float32)
    conv1 = shift_add(t1[:, :wc], t1[:, wc:2 * wc], t1[:, 2 * wc:3 * wc])
    sc_lin = t1[:, 3 * wc:]

    out1 = jnp.maximum(bn(conv1, g1_ref, b1_ref), 0.0)   # relu(bn1(conv1))

    # conv2: three vertical taps fused into one dot [up | mid | dn].
    t2 = jnp.dot(out1.astype(jnp.bfloat16), a2_ref[...],
                 preferred_element_type=jnp.float32)
    conv2 = shift_add(t2[:, :wc], t2[:, wc:2 * wc], t2[:, 2 * wc:])

    out2 = bn(conv2, g2_ref, b2_ref)
    sc = bn(sc_lin, gs_ref, bs_ref)

    out_ref[...] = jnp.maximum(out2 + sc, 0.0)           # lane-dense store


def _banded_conv_weights(w_hwio, W):
    """(3,3,Cin,Co) HWIO -> list of 3 per-ky (W*Cin, W*Co) block-tridiagonal
    matrices. kx taps, Cin contraction and W zero-padding are folded into the
    band structure; vertical taps stay separate (handled by roll in-kernel)."""
    diag = {0: 1, 1: 0, 2: -1}     # kx -> band offset (input col = w + kx - 1)
    return [sum(jnp.kron(jnp.eye(W, k=diag[kx], dtype=jnp.float32),
                         w_hwio[ky, kx])
                for kx in range(3))
            for ky in range(3)]


def basic_block_pallas(x_nchw, params):
    # TODO(synk): when chaining BasicBlocks keep the lane-dense (N*H, W*C)
    # layout (and bf16 output) across blocks so the NCHW<->NHWC transposes are
    # paid once per network, not per block.
    N, Cin, H, W = x_nchw.shape
    Cm = params["g1"].shape[-1]
    WC = W * Cm

    # NCHW -> lane-dense (N*H, W*Cin); MXU operands in bf16 (f32 accumulate).
    x2d = (jnp.transpose(x_nchw, (0, 2, 3, 1))
           .reshape(N * H, W * Cin).astype(jnp.bfloat16))

    # Fused conv weights (host-side, one-time).
    taps1 = _banded_conv_weights(params["w1"], W)                   # 3 x (W*Cin, WC)
    a_s = jnp.kron(jnp.eye(W, dtype=jnp.float32), params["ws"])    # (W*Cin, WC)
    a1 = jnp.concatenate([taps1[0], taps1[1], taps1[2], a_s],
                         axis=1).astype(jnp.bfloat16)               # (W*Cin, 4*WC)
    taps2 = _banded_conv_weights(params["w2"], W)                   # 3 x (WC, WC)
    a2 = jnp.concatenate(taps2, axis=1).astype(jnp.bfloat16)        # (WC, 3*WC)
    # TODO(synk): at ResNet-scale W use a W-blocked conv so the block-banded
    # fold does not multiply structural zeros (~W/3 redundant MACs).

    # BN channel fold / tile matrices (kept f32 so the stats fold is f32).
    p = jnp.tile(jnp.eye(Cm, dtype=jnp.float32), (W, 1))            # (WC, Cm)
    pt = jnp.tile(jnp.eye(Cm, dtype=jnp.float32), (1, W))           # (Cm, WC)

    g1, b1 = params["g1"].reshape(1, Cm), params["b1"].reshape(1, Cm)
    g2, b2 = params["g2"].reshape(1, Cm), params["b2"].reshape(1, Cm)
    gs, bs = params["gs"].reshape(1, Cm), params["bs"].reshape(1, Cm)

    vmem = pl.BlockSpec(memory_space=pltpu.MemorySpace.VMEM)
    kernel = functools.partial(_basic_block_kernel, h_img=H,
                               inv_m=1.0 / float(N * H * W))
    # TODO(synk): for large N*H add a row-band grid ("parallel") with a
    # two-phase BN-stats pass and explicit vmem_limit_bytes (v7x: 2 TCs,
    # 64 MiB VMEM); at these sizes everything fits one ungridded call.
    out2d = pl.pallas_call(
        kernel,
        out_shape=jax.ShapeDtypeStruct((N * H, WC), jnp.float32),
        in_specs=[vmem] * 11,
        out_specs=vmem,
    )(x2d, a1, a2, p, pt, g1, b1, g2, b2, gs, bs)

    out = out2d.reshape(N, H, W, Cm)
    return jnp.transpose(out, (0, 3, 1, 2))     # NHWC -> NCHW


def basic_block_ref(x_nchw, params):
    # Pure-JAX f32 reference (same math) for correctness checking.
    x = jnp.transpose(x_nchw, (0, 2, 3, 1)).astype(jnp.float32)

    def conv(x, w):
        return jax.lax.conv_general_dilated(
            x, w, (1, 1), ((1, 1), (1, 1)),
            dimension_numbers=("NHWC", "HWIO", "NHWC"))

    def bn(x, g, b):
        mean = jnp.mean(x, axis=(0, 1, 2), keepdims=True)
        var = jnp.mean((x - mean) ** 2, axis=(0, 1, 2), keepdims=True)
        return (x - mean) * jax.lax.rsqrt(var + EPS) * g + b

    out = jax.nn.relu(bn(conv(x, params["w1"]), params["g1"], params["b1"]))
    out = bn(conv(out, params["w2"]), params["g2"], params["b2"])
    sc = bn(jnp.einsum("nhwc,co->nhwo", x, params["ws"]),
            params["gs"], params["bs"])
    out = jax.nn.relu(out + sc)
    return jnp.transpose(out, (0, 3, 1, 2))


def make_params(key, in_planes, planes):
    ks = jax.random.split(key, 9)
    return {
        "w1": jax.random.normal(ks[0], (3, 3, in_planes, planes), jnp.float32) * 0.1,
        "w2": jax.random.normal(ks[1], (3, 3, planes, planes), jnp.float32) * 0.1,
        "ws": jax.random.normal(ks[2], (in_planes, planes), jnp.float32) * 0.1,
        "g1": 1.0 + 0.1 * jax.random.normal(ks[3], (planes,), jnp.float32),
        "b1": 0.1 * jax.random.normal(ks[4], (planes,), jnp.float32),
        "g2": 1.0 + 0.1 * jax.random.normal(ks[5], (planes,), jnp.float32),
        "b2": 0.1 * jax.random.normal(ks[6], (planes,), jnp.float32),
        "gs": 1.0 + 0.1 * jax.random.normal(ks[7], (planes,), jnp.float32),
        "bs": 0.1 * jax.random.normal(ks[8], (planes,), jnp.float32),
    }


if __name__ == "__main__":
    key = jax.random.PRNGKey(0)
    k_x, k_p = jax.random.split(key)

    N, Cin, Cm, H, W = 2, 4, 8, 16, 16          # in_planes=4, planes=8, stride=1
    x = jax.random.normal(k_x, (N, Cin, H, W), jnp.float32)
    params = make_params(k_p, Cin, Cm)

    out = jax.block_until_ready(basic_block_pallas(x, params))
    ref = jax.block_until_ready(basic_block_ref(x, params))

    assert out.shape == (N, Cm, H, W), out.shape
    # bf16 matmul operands (f32 accumulation) vs pure-f32 reference => looser
    # tolerance than an all-f32 run; BN/ReLU math is f32 in both.
    np.testing.assert_allclose(np.asarray(out), np.asarray(ref),
                               rtol=2e-2, atol=2e-2)
    print("KERNEL_OK")
</pallas_src>

<mosaic_0001>
module attributes {stable_mosaic.version = 11 : i64} {
  func.func @_basic_block_kernel(%arg0: memref<32x64xbf16, #tpu.memory_space<vmem>>, %arg1: memref<64x512xbf16, #tpu.memory_space<vmem>>, %arg2: memref<128x384xbf16, #tpu.memory_space<vmem>>, %arg3: memref<128x8xf32, #tpu.memory_space<vmem>>, %arg4: memref<8x128xf32, #tpu.memory_space<vmem>>, %arg5: memref<1x8xf32, #tpu.memory_space<vmem>>, %arg6: memref<1x8xf32, #tpu.memory_space<vmem>>, %arg7: memref<1x8xf32, #tpu.memory_space<vmem>>, %arg8: memref<1x8xf32, #tpu.memory_space<vmem>>, %arg9: memref<1x8xf32, #tpu.memory_space<vmem>>, %arg10: memref<1x8xf32, #tpu.memory_space<vmem>>, %arg11: memref<32x128xf32, #tpu.memory_space<vmem>>) attributes {dimension_semantics = [], scalar_prefetch = 0 : i64, scratch_operands = 0 : i64, tpu.core_type = #tpu.core_type<tc>} {
    %0 = tpu.iota {dimensions = array<i32: 0>} : vector<32x1xi32>
    %c16_i32 = arith.constant 16 : i32
    %c0_i32 = arith.constant 0 : i32
    %1 = arith.cmpi eq, %c16_i32, %c0_i32 : i32
    %c1_i32 = arith.constant 1 : i32
    %2 = arith.select %1, %c1_i32, %c16_i32 : i32
    %3 = vector.broadcast %2 : i32 to vector<32x1xi32>
    %4 = arith.remsi %0, %3 : vector<32x1xi32>
    %c0_i32_0 = arith.constant 0 : i32
    %5 = vector.broadcast %c0_i32_0 : i32 to vector<32x1xi32>
    %6 = arith.cmpi ne, %4, %5 : vector<32x1xi32>
    %c0_i32_1 = arith.constant 0 : i32
    %7 = vector.broadcast %c0_i32_1 : i32 to vector<32x1xi32>
    %8 = arith.cmpi slt, %4, %7 : vector<32x1xi32>
    %c0_i32_2 = arith.constant 0 : i32
    %9 = arith.cmpi slt, %2, %c0_i32_2 : i32
    %10 = vector.broadcast %9 : i1 to vector<32x1xi1>
    %11 = vector.broadcast %10 : vector<32x1xi1> to vector<32x1xi1>
    %12 = arith.xori %8, %11 : vector<32x1xi1>
    %13 = arith.andi %12, %6 : vector<32x1xi1>
    %14 = vector.broadcast %2 : i32 to vector<32x1xi32>
    %15 = arith.addi %4, %14 : vector<32x1xi32>
    %16 = arith.select %13, %15, %4 : vector<32x1xi1>, vector<32x1xi32>
    %c0_i32_3 = arith.constant 0 : i32
    %17 = vector.broadcast %c0_i32_3 : i32 to vector<32x1xi32>
    %18 = arith.cmpi ne, %16, %17 : vector<32x1xi32>
    %19 = arith.extui %18 : vector<32x1xi1> to vector<32x1xi32>
    %20 = arith.sitofp %19 : vector<32x1xi32> to vector<32x1xf32>
    %c15_i32 = arith.constant 15 : i32
    %21 = vector.broadcast %c15_i32 : i32 to vector<32x1xi32>
    %22 = arith.cmpi ne, %16, %21 : vector<32x1xi32>
    %23 = arith.extui %22 : vector<32x1xi1> to vector<32x1xi32>
    %24 = arith.sitofp %23 : vector<32x1xi32> to vector<32x1xf32>
    %c0 = arith.constant 0 : index
    %c0_4 = arith.constant 0 : index
    %25 = vector.load %arg0[%c0, %c0_4] : memref<32x64xbf16, #tpu.memory_space<vmem>>, vector<32x64xbf16>
    %c0_5 = arith.constant 0 : index
    %c0_6 = arith.constant 0 : index
    %26 = vector.load %arg1[%c0_5, %c0_6] : memref<64x512xbf16, #tpu.memory_space<vmem>>, vector<64x512xbf16>
    %cst = arith.constant dense<0.000000e+00> : vector<32x512xf32>
    %27 = tpu.matmul %25, %26, %cst {dimension_numbers = #tpu.dot_dimension_numbers<[1], [0], [0], [1], [0, 0, 1, 1], [], []>} : vector<32x64xbf16>, vector<64x512xbf16>, vector<32x512xf32> -> vector<32x512xf32>
    %28 = vector.extract_strided_slice %27 {offsets = [0, 0], sizes = [32, 128], strides = [1, 1]} : vector<32x512xf32> to vector<32x128xf32>
    %29 = vector.extract_strided_slice %27 {offsets = [0, 128], sizes = [32, 128], strides = [1, 1]} : vector<32x512xf32> to vector<32x128xf32>
    %30 = vector.extract_strided_slice %27 {offsets = [0, 256], sizes = [32, 128], strides = [1, 1]} : vector<32x512xf32> to vector<32x128xf32>
    %c1_i32_7 = arith.constant 1 : i32
    %31 = tpu.dynamic_rotate %28 by %c1_i32_7 dim 0 : vector<32x128xf32>, i32 -> vector<32x128xf32>
    %32 = vector.broadcast %20 : vector<32x1xf32> to vector<32x128xf32>
    %33 = arith.mulf %32, %31 : vector<32x128xf32>
    %c31_i32 = arith.constant 31 : i32
    %34 = tpu.dynamic_rotate %30 by %c31_i32 dim 0 : vector<32x128xf32>, i32 -> vector<32x128xf32>
    %35 = vector.broadcast %24 : vector<32x1xf32> to vector<32x128xf32>
    %36 = arith.mulf %35, %34 : vector<32x128xf32>
    %37 = arith.addf %29, %33 : vector<32x128xf32>
    %38 = arith.addf %37, %36 : vector<32x128xf32>
    %39 = vector.extract_strided_slice %27 {offsets = [0, 384], sizes = [32, 128], strides = [1, 1]} : vector<32x512xf32> to vector<32x128xf32>
    %cst_8 = arith.constant dense<0.000000e+00> : vector<128xf32>
    %40 = vector.multi_reduction <add>, %38, %cst_8 [0] : vector<32x128xf32> to vector<128xf32>
    %41 = vector.shape_cast %40 : vector<128xf32> to vector<1x128xf32>
    %42 = arith.mulf %38, %38 : vector<32x128xf32>
    %cst_9 = arith.constant dense<0.000000e+00> : vector<128xf32>
    %43 = vector.multi_reduction <add>, %42, %cst_9 [0] : vector<32x128xf32> to vector<128xf32>
    %44 = vector.shape_cast %43 : vector<128xf32> to vector<1x128xf32>
    %45 = tpu.iota {dimensions = array<i32: 0>} : vector<2x128xi32>
    %c0_i32_10 = arith.constant 0 : i32
    %46 = vector.broadcast %c0_i32_10 : i32 to vector<2x128xi32>
    %47 = arith.cmpi eq, %45, %46 : vector<2x128xi32>
    %48 = vector.shape_cast %41 : vector<1x128xf32> to vector<1x128xf32>
    %49 = vector.broadcast %48 : vector<1x128xf32> to vector<2x128xf32>
    %50 = vector.shape_cast %44 : vector<1x128xf32> to vector<1x128xf32>
    %51 = vector.broadcast %50 : vector<1x128xf32> to vector<2x128xf32>
    %52 = arith.select %47, %49, %51 : vector<2x128xi1>, vector<2x128xf32>
    %c0_11 = arith.constant 0 : index
    %c0_12 = arith.constant 0 : index
    %53 = vector.load %arg3[%c0_11, %c0_12] : memref<128x8xf32, #tpu.memory_space<vmem>>, vector<128x8xf32>
    %cst_13 = arith.constant dense<0.000000e+00> : vector<2x8xf32>
    %54 = tpu.matmul %52, %53, %cst_13 {dimension_numbers = #tpu.dot_dimension_numbers<[1], [0], [0], [1], [0, 0, 1, 1], [], []>} : vector<2x128xf32>, vector<128x8xf32>, vector<2x8xf32> -> vector<2x8xf32>
    %55 = vector.extract_strided_slice %54 {offsets = [0, 0], sizes = [1, 8], strides = [1, 1]} : vector<2x8xf32> to vector<1x8xf32>
    %cst_14 = arith.constant 0.001953125 : f32
    %56 = vector.broadcast %cst_14 : f32 to vector<1x8xf32>
    %57 = arith.mulf %55, %56 : vector<1x8xf32>
    %58 = vector.extract_strided_slice %54 {offsets = [1, 0], sizes = [1, 8], strides = [1, 1]} : vector<2x8xf32> to vector<1x8xf32>
    %cst_15 = arith.constant 0.001953125 : f32
    %59 = vector.broadcast %cst_15 : f32 to vector<1x8xf32>
    %60 = arith.mulf %58, %59 : vector<1x8xf32>
    %61 = arith.mulf %57, %57 : vector<1x8xf32>
    %62 = arith.subf %60, %61 : vector<1x8xf32>
    %cst_16 = arith.constant 0.000000e+00 : f32
    %63 = vector.broadcast %cst_16 : f32 to vector<1x8xf32>
    %64 = arith.maximumf %62, %63 : vector<1x8xf32>
    %c0_17 = arith.constant 0 : index
    %c0_18 = arith.constant 0 : index
    %65 = vector.load %arg5[%c0_17, %c0_18] : memref<1x8xf32, #tpu.memory_space<vmem>>, vector<1x8xf32>
    %cst_19 = arith.constant 9.99999974E-6 : f32
    %66 = vector.broadcast %cst_19 : f32 to vector<1x8xf32>
    %67 = arith.addf %64, %66 : vector<1x8xf32>
    %68 = math.rsqrt %67 : vector<1x8xf32>
    %69 = arith.mulf %65, %68 : vector<1x8xf32>
    %c0_20 = arith.constant 0 : index
    %c0_21 = arith.constant 0 : index
    %70 = vector.load %arg6[%c0_20, %c0_21] : memref<1x8xf32, #tpu.memory_space<vmem>>, vector<1x8xf32>
    %71 = arith.mulf %57, %69 : vector<1x8xf32>
    %72 = arith.subf %70, %71 : vector<1x8xf32>
    %73 = tpu.iota {dimensions = array<i32: 0>} : vector<2x8xi32>
    %c0_i32_22 = arith.constant 0 : i32
    %74 = vector.broadcast %c0_i32_22 : i32 to vector<2x8xi32>
    %75 = arith.cmpi eq, %73, %74 : vector<2x8xi32>
    %76 = vector.shape_cast %69 : vector<1x8xf32> to vector<1x8xf32>
    %77 = vector.broadcast %76 : vector<1x8xf32> to vector<2x8xf32>
    %78 = vector.shape_cast %72 : vector<1x8xf32> to vector<1x8xf32>
    %79 = vector.broadcast %78 : vector<1x8xf32> to vector<2x8xf32>
    %80 = arith.select %75, %77, %79 : vector<2x8xi1>, vector<2x8xf32>
    %c0_23 = arith.constant 0 : index
    %c0_24 = arith.constant 0 : index
    %81 = vector.load %arg4[%c0_23, %c0_24] : memref<8x128xf32, #tpu.memory_space<vmem>>, vector<8x128xf32>
    %cst_25 = arith.constant dense<0.000000e+00> : vector<2x128xf32>
    %82 = tpu.matmul %80, %81, %cst_25 {dimension_numbers = #tpu.dot_dimension_numbers<[1], [0], [0], [1], [0, 0, 1, 1], [], []>} : vector<2x8xf32>, vector<8x128xf32>, vector<2x128xf32> -> vector<2x128xf32>
    %83 = vector.extract_strided_slice %82 {offsets = [0, 0], sizes = [1, 128], strides = [1, 1]} : vector<2x128xf32> to vector<1x128xf32>
    %84 = vector.broadcast %83 : vector<1x128xf32> to vector<32x128xf32>
    %85 = arith.mulf %38, %84 : vector<32x128xf32>
    %86 = vector.extract_strided_slice %82 {offsets = [1, 0], sizes = [1, 128], strides = [1, 1]} : vector<2x128xf32> to vector<1x128xf32>
    %87 = vector.broadcast %86 : vector<1x128xf32> to vector<32x128xf32>
    %88 = arith.addf %85, %87 : vector<32x128xf32>
    %cst_26 = arith.constant 0.000000e+00 : f32
    %89 = vector.broadcast %cst_26 : f32 to vector<32x128xf32>
    %90 = arith.maximumf %88, %89 : vector<32x128xf32>
    %91 = arith.truncf %90 : vector<32x128xf32> to vector<32x128xbf16>
    %c0_27 = arith.constant 0 : index
    %c0_28 = arith.constant 0 : index
    %92 = vector.load %arg2[%c0_27, %c0_28] : memref<128x384xbf16, #tpu.memory_space<vmem>>, vector<128x384xbf16>
    %cst_29 = arith.constant dense<0.000000e+00> : vector<32x384xf32>
    %93 = tpu.matmul %91, %92, %cst_29 {dimension_numbers = #tpu.dot_dimension_numbers<[1], [0], [0], [1], [0, 0, 1, 1], [], []>} : vector<32x128xbf16>, vector<128x384xbf16>, vector<32x384xf32> -> vector<32x384xf32>
    %94 = vector.extract_strided_slice %93 {offsets = [0, 0], sizes = [32, 128], strides = [1, 1]} : vector<32x384xf32> to vector<32x128xf32>
    %95 = vector.extract_strided_slice %93 {offsets = [0, 128], sizes = [32, 128], strides = [1, 1]} : vector<32x384xf32> to vector<32x128xf32>
    %96 = vector.extract_strided_slice %93 {offsets = [0, 256], sizes = [32, 128], strides = [1, 1]} : vector<32x384xf32> to vector<32x128xf32>
    %c1_i32_30 = arith.constant 1 : i32
    %97 = tpu.dynamic_rotate %94 by %c1_i32_30 dim 0 : vector<32x128xf32>, i32 -> vector<32x128xf32>
    %98 = vector.broadcast %20 : vector<32x1xf32> to vector<32x128xf32>
    %99 = arith.mulf %98, %97 : vector<32x128xf32>
    %c31_i32_31 = arith.constant 31 : i32
    %100 = tpu.dynamic_rotate %96 by %c31_i32_31 dim 0 : vector<32x128xf32>, i32 -> vector<32x128xf32>
    %101 = vector.broadcast %24 : vector<32x1xf32> to vector<32x128xf32>
    %102 = arith.mulf %101, %100 : vector<32x128xf32>
    %103 = arith.addf %95, %99 : vector<32x128xf32>
    %104 = arith.addf %103, %102 : vector<32x128xf32>
    %cst_32 = arith.constant dense<0.000000e+00> : vector<128xf32>
    %105 = vector.multi_reduction <add>, %104, %cst_32 [0] : vector<32x128xf32> to vector<128xf32>
    %106 = vector.shape_cast %105 : vector<128xf32> to vector<1x128xf32>
    %107 = arith.mulf %104, %104 : vector<32x128xf32>
    %cst_33 = arith.constant dense<0.000000e+00> : vector<128xf32>
    %108 = vector.multi_reduction <add>, %107, %cst_33 [0] : vector<32x128xf32> to vector<128xf32>
    %109 = vector.shape_cast %108 : vector<128xf32> to vector<1x128xf32>
    %110 = tpu.iota {dimensions = array<i32: 0>} : vector<2x128xi32>
    %c0_i32_34 = arith.constant 0 : i32
    %111 = vector.broadcast %c0_i32_34 : i32 to vector<2x128xi32>
    %112 = arith.cmpi eq, %110, %111 : vector<2x128xi32>
    %113 = vector.shape_cast %106 : vector<1x128xf32> to vector<1x128xf32>
    %114 = vector.broadcast %113 : vector<1x128xf32> to vector<2x128xf32>
    %115 = vector.shape_cast %109 : vector<1x128xf32> to vector<1x128xf32>
    %116 = vector.broadcast %115 : vector<1x128xf32> to vector<2x128xf32>
    %117 = arith.select %112, %114, %116 : vector<2x128xi1>, vector<2x128xf32>
    %c0_35 = arith.constant 0 : index
    %c0_36 = arith.constant 0 : index
    %118 = vector.load %arg3[%c0_35, %c0_36] : memref<128x8xf32, #tpu.memory_space<vmem>>, vector<128x8xf32>
    %cst_37 = arith.constant dense<0.000000e+00> : vector<2x8xf32>
    %119 = tpu.matmul %117, %118, %cst_37 {dimension_numbers = #tpu.dot_dimension_numbers<[1], [0], [0], [1], [0, 0, 1, 1], [], []>} : vector<2x128xf32>, vector<128x8xf32>, vector<2x8xf32> -> vector<2x8xf32>
    %120 = vector.extract_strided_slice %119 {offsets = [0, 0], sizes = [1, 8], strides = [1, 1]} : vector<2x8xf32> to vector<1x8xf32>
    %cst_38 = arith.constant 0.001953125 : f32
    %121 = vector.broadcast %cst_38 : f32 to vector<1x8xf32>
    %122 = arith.mulf %120, %121 : vector<1x8xf32>
    %123 = vector.extract_strided_slice %119 {offsets = [1, 0], sizes = [1, 8], strides = [1, 1]} : vector<2x8xf32> to vector<1x8xf32>
    %cst_39 = arith.constant 0.001953125 : f32
    %124 = vector.broadcast %cst_39 : f32 to vector<1x8xf32>
    %125 = arith.mulf %123, %124 : vector<1x8xf32>
    %126 = arith.mulf %122, %122 : vector<1x8xf32>
    %127 = arith.subf %125, %126 : vector<1x8xf32>
    %cst_40 = arith.constant 0.000000e+00 : f32
    %128 = vector.broadcast %cst_40 : f32 to vector<1x8xf32>
    %129 = arith.maximumf %127, %128 : vector<1x8xf32>
    %c0_41 = arith.constant 0 : index
    %c0_42 = arith.constant 0 : index
    %130 = vector.load %arg7[%c0_41, %c0_42] : memref<1x8xf32, #tpu.memory_space<vmem>>, vector<1x8xf32>
    %cst_43 = arith.constant 9.99999974E-6 : f32
    %131 = vector.broadcast %cst_43 : f32 to vector<1x8xf32>
    %132 = arith.addf %129, %131 : vector<1x8xf32>
    %133 = math.rsqrt %132 : vector<1x8xf32>
    %134 = arith.mulf %130, %133 : vector<1x8xf32>
    %c0_44 = arith.constant 0 : index
    %c0_45 = arith.constant 0 : index
    %135 = vector.load %arg8[%c0_44, %c0_45] : memref<1x8xf32, #tpu.memory_space<vmem>>, vector<1x8xf32>
    %136 = arith.mulf %122, %134 : vector<1x8xf32>
    %137 = arith.subf %135, %136 : vector<1x8xf32>
    %138 = tpu.iota {dimensions = array<i32: 0>} : vector<2x8xi32>
    %c0_i32_46 = arith.constant 0 : i32
    %139 = vector.broadcast %c0_i32_46 : i32 to vector<2x8xi32>
    %140 = arith.cmpi eq, %138, %139 : vector<2x8xi32>
    %141 = vector.shape_cast %134 : vector<1x8xf32> to vector<1x8xf32>
    %142 = vector.broadcast %141 : vector<1x8xf32> to vector<2x8xf32>
    %143 = vector.shape_cast %137 : vector<1x8xf32> to vector<1x8xf32>
    %144 = vector.broadcast %143 : vector<1x8xf32> to vector<2x8xf32>
    %145 = arith.select %140, %142, %144 : vector<2x8xi1>, vector<2x8xf32>
    %c0_47 = arith.constant 0 : index
    %c0_48 = arith.constant 0 : index
    %146 = vector.load %arg4[%c0_47, %c0_48] : memref<8x128xf32, #tpu.memory_space<vmem>>, vector<8x128xf32>
    %cst_49 = arith.constant dense<0.000000e+00> : vector<2x128xf32>
    %147 = tpu.matmul %145, %146, %cst_49 {dimension_numbers = #tpu.dot_dimension_numbers<[1], [0], [0], [1], [0, 0, 1, 1], [], []>} : vector<2x8xf32>, vector<8x128xf32>, vector<2x128xf32> -> vector<2x128xf32>
    %148 = vector.extract_strided_slice %147 {offsets = [0, 0], sizes = [1, 128], strides = [1, 1]} : vector<2x128xf32> to vector<1x128xf32>
    %149 = vector.broadcast %148 : vector<1x128xf32> to vector<32x128xf32>
    %150 = arith.mulf %104, %149 : vector<32x128xf32>
    %151 = vector.extract_strided_slice %147 {offsets = [1, 0], sizes = [1, 128], strides = [1, 1]} : vector<2x128xf32> to vector<1x128xf32>
    %152 = vector.broadcast %151 : vector<1x128xf32> to vector<32x128xf32>
    %153 = arith.addf %150, %152 : vector<32x128xf32>
    %cst_50 = arith.constant dense<0.000000e+00> : vector<128xf32>
    %154 = vector.multi_reduction <add>, %39, %cst_50 [0] : vector<32x128xf32> to vector<128xf32>
    %155 = vector.shape_cast %154 : vector<128xf32> to vector<1x128xf32>
    %156 = arith.mulf %39, %39 : vector<32x128xf32>
    %cst_51 = arith.constant dense<0.000000e+00> : vector<128xf32>
    %157 = vector.multi_reduction <add>, %156, %cst_51 [0] : vector<32x128xf32> to vector<128xf32>
    %158 = vector.shape_cast %157 : vector<128xf32> to vector<1x128xf32>
    %159 = tpu.iota {dimensions = array<i32: 0>} : vector<2x128xi32>
    %c0_i32_52 = arith.constant 0 : i32
    %160 = vector.broadcast %c0_i32_52 : i32 to vector<2x128xi32>
    %161 = arith.cmpi eq, %159, %160 : vector<2x128xi32>
    %162 = vector.shape_cast %155 : vector<1x128xf32> to vector<1x128xf32>
    %163 = vector.broadcast %162 : vector<1x128xf32> to vector<2x128xf32>
    %164 = vector.shape_cast %158 : vector<1x128xf32> to vector<1x128xf32>
    %165 = vector.broadcast %164 : vector<1x128xf32> to vector<2x128xf32>
    %166 = arith.select %161, %163, %165 : vector<2x128xi1>, vector<2x128xf32>
    %c0_53 = arith.constant 0 : index
    %c0_54 = arith.constant 0 : index
    %167 = vector.load %arg3[%c0_53, %c0_54] : memref<128x8xf32, #tpu.memory_space<vmem>>, vector<128x8xf32>
    %cst_55 = arith.constant dense<0.000000e+00> : vector<2x8xf32>
    %168 = tpu.matmul %166, %167, %cst_55 {dimension_numbers = #tpu.dot_dimension_numbers<[1], [0], [0], [1], [0, 0, 1, 1], [], []>} : vector<2x128xf32>, vector<128x8xf32>, vector<2x8xf32> -> vector<2x8xf32>
    %169 = vector.extract_strided_slice %168 {offsets = [0, 0], sizes = [1, 8], strides = [1, 1]} : vector<2x8xf32> to vector<1x8xf32>
    %cst_56 = arith.constant 0.001953125 : f32
    %170 = vector.broadcast %cst_56 : f32 to vector<1x8xf32>
    %171 = arith.mulf %169, %170 : vector<1x8xf32>
    %172 = vector.extract_strided_slice %168 {offsets = [1, 0], sizes = [1, 8], strides = [1, 1]} : vector<2x8xf32> to vector<1x8xf32>
    %cst_57 = arith.constant 0.001953125 : f32
    %173 = vector.broadcast %cst_57 : f32 to vector<1x8xf32>
    %174 = arith.mulf %172, %173 : vector<1x8xf32>
    %175 = arith.mulf %171, %171 : vector<1x8xf32>
    %176 = arith.subf %174, %175 : vector<1x8xf32>
    %cst_58 = arith.constant 0.000000e+00 : f32
    %177 = vector.broadcast %cst_58 : f32 to vector<1x8xf32>
    %178 = arith.maximumf %176, %177 : vector<1x8xf32>
    %c0_59 = arith.constant 0 : index
    %c0_60 = arith.constant 0 : index
    %179 = vector.load %arg9[%c0_59, %c0_60] : memref<1x8xf32, #tpu.memory_space<vmem>>, vector<1x8xf32>
    %cst_61 = arith.constant 9.99999974E-6 : f32
    %180 = vector.broadcast %cst_61 : f32 to vector<1x8xf32>
    %181 = arith.addf %178, %180 : vector<1x8xf32>
    %182 = math.rsqrt %181 : vector<1x8xf32>
    %183 = arith.mulf %179, %182 : vector<1x8xf32>
    %c0_62 = arith.constant 0 : index
    %c0_63 = arith.constant 0 : index
    %184 = vector.load %arg10[%c0_62, %c0_63] : memref<1x8xf32, #tpu.memory_space<vmem>>, vector<1x8xf32>
    %185 = arith.mulf %171, %183 : vector<1x8xf32>
    %186 = arith.subf %184, %185 : vector<1x8xf32>
    %187 = tpu.iota {dimensions = array<i32: 0>} : vector<2x8xi32>
    %c0_i32_64 = arith.constant 0 : i32
    %188 = vector.broadcast %c0_i32_64 : i32 to vector<2x8xi32>
    %189 = arith.cmpi eq, %187, %188 : vector<2x8xi32>
    %190 = vector.shape_cast %183 : vector<1x8xf32> to vector<1x8xf32>
    %191 = vector.broadcast %190 : vector<1x8xf32> to vector<2x8xf32>
    %192 = vector.shape_cast %186 : vector<1x8xf32> to vector<1x8xf32>
    %193 = vector.broadcast %192 : vector<1x8xf32> to vector<2x8xf32>
    %194 = arith.select %189, %191, %193 : vector<2x8xi1>, vector<2x8xf32>
    %c0_65 = arith.constant 0 : index
    %c0_66 = arith.constant 0 : index
    %195 = vector.load %arg4[%c0_65, %c0_66] : memref<8x128xf32, #tpu.memory_space<vmem>>, vector<8x128xf32>
    %cst_67 = arith.constant dense<0.000000e+00> : vector<2x128xf32>
    %196 = tpu.matmul %194, %195, %cst_67 {dimension_numbers = #tpu.dot_dimension_numbers<[1], [0], [0], [1], [0, 0, 1, 1], [], []>} : vector<2x8xf32>, vector<8x128xf32>, vector<2x128xf32> -> vector<2x128xf32>
    %197 = vector.extract_strided_slice %196 {offsets = [0, 0], sizes = [1, 128], strides = [1, 1]} : vector<2x128xf32> to vector<1x128xf32>
    %198 = vector.broadcast %197 : vector<1x128xf32> to vector<32x128xf32>
    %199 = arith.mulf %39, %198 : vector<32x128xf32>
    %200 = vector.extract_strided_slice %196 {offsets = [1, 0], sizes = [1, 128], strides = [1, 1]} : vector<2x128xf32> to vector<1x128xf32>
    %201 = vector.broadcast %200 : vector<1x128xf32> to vector<32x128xf32>
    %202 = arith.addf %199, %201 : vector<32x128xf32>
    %203 = arith.addf %153, %202 : vector<32x128xf32>
    %cst_68 = arith.constant 0.000000e+00 : f32
    %204 = vector.broadcast %cst_68 : f32 to vector<32x128xf32>
    %205 = arith.maximumf %203, %204 : vector<32x128xf32>
    %c0_69 = arith.constant 0 : index
    %c0_70 = arith.constant 0 : index
    %206 = vector.load %arg11[%c0_69, %c0_70] : memref<32x128xf32, #tpu.memory_space<vmem>>, vector<32x128xf32>
    tpu.vector_store %arg11[%c0_69, %c0_70], %205 {strides = array<i32>} : memref<32x128xf32, #tpu.memory_space<vmem>>, vector<32x128xf32>,
    return
  }
}

</mosaic_0001>

<llo_original>
// kernel: tpu_custom_call.1
$region0: #{tpu_custom_call.1}
  #allocation0 [shape = 'u32[]', space=smem, size = 0x4, offset = 0x4, fixed_abs, tag = 'smem constant byte address 0x4 - core index']
  #allocation1 [shape = 'u32[144,128]{1,0:T(1,128)}', space=vmem, size = 0x12000, scoped, tag = 'internal scratch']
  %s0 = inlined_call_operand.hbm [shape: bf16[32,64], index: 0, kind: input, shape index: {}]
  %s1 = inlined_call_operand.vmem [shape: bf16[64,512], index: 1, kind: input, shape index: {}]
  %s2 = inlined_call_operand.hbm [shape: bf16[128,384], index: 2, kind: input, shape index: {}]
  %s3 = inlined_call_operand.vmem [shape: f32[128,8], index: 3, kind: input, shape index: {}]
  %s4 = inlined_call_operand.vmem [shape: f32[8,128], index: 4, kind: input, shape index: {}]
  %s5 = inlined_call_operand.vmem [shape: f32[1,8], index: 5, kind: input, shape index: {}]
  %s6 = inlined_call_operand.vmem [shape: f32[1,8], index: 6, kind: input, shape index: {}]
  %s7 = inlined_call_operand.vmem [shape: f32[1,8], index: 7, kind: input, shape index: {}]
  %s8 = inlined_call_operand.vmem [shape: f32[1,8], index: 8, kind: input, shape index: {}]
  %s9 = inlined_call_operand.vmem [shape: f32[1,8], index: 9, kind: input, shape index: {}]
  %s10 = inlined_call_operand.vmem [shape: f32[1,8], index: 10, kind: input, shape index: {}]
  %s11 = inlined_call_operand.hbm [shape: f32[32,128], index: 11, kind: output, shape index: {}]
  %s12 = sld [smem:[#allocation0]]
  $region62: #{tpu_custom_call.1} parent=0
    _
  %s14 = ssub.s32 1, %s12
  %s15 = scalar_select 0, %s14, %s12
  $region1: #{tpu_custom_call.1} parent=0
    #allocation2 [shape = 'u8[8192]{0}', space=vmem, size = 0x2000, scoped, tag = 'input window, operand 0, single buffered']
    #allocation3 [shape = 's32[1]{0}', space=sflag, size = 0x4, scoped, tag = 'scoped memory for tpu_custom_call.1']
    #allocation4 [shape = 's32[1]{0}', space=sflag, size = 0x4, scoped, tag = 'scoped memory for tpu_custom_call.1']
    #allocation5 [shape = 'u8[98304]{0}', space=vmem, size = 0x18000, scoped, tag = 'input window, operand 2, single buffered']
    #allocation6 [shape = 's32[1]{0}', space=sflag, size = 0x4, scoped, tag = 'scoped memory for tpu_custom_call.1']
    #allocation7 [shape = 'u8[16384]{0}', space=vmem, size = 0x4000, scoped, tag = 'output window, operand 0, single buffered']
    %16 = vsyncpa [#allocation3], 0
    %17 = vsyncpa [#allocation6], 0
    %18 = vsyncpa [#allocation4], 0
    // Predicated region
    $region2: #{tpu_custom_call.1} parent=1 // pred_check
      _
    $region3: #{tpu_custom_call.1} parent=1 // pred_check_branch
      %20 = sbr.rel (0) target = $region5
    $region4: #{tpu_custom_call.1} parent=1 // pred_region
      %s22 = ssub.s32 256, 256
      %23 = vsyncadd [#allocation3], %s22
      %s24 = sshll.u32 [#allocation2], 4
      %s25 = int_to_ptr.vmem [resolvable:$true] %s24
      %30 = dma.hbm_to_vmem [thread:$0]  %s0, 256, %s25, [#allocation3], 64, 64, 4
    $region5: #{tpu_custom_call.1} parent=1 // pred_fallthru
      _
    // Predicated region
    $region6: #{tpu_custom_call.1} parent=1 // pred_check
      _
    $region7: #{tpu_custom_call.1} parent=1 // pred_check_branch
      %32 = sbr.rel (0) target = $region9
    $region8: #{tpu_custom_call.1} parent=1 // pred_region
      _
    $region9: #{tpu_custom_call.1} parent=1 // pred_fallthru
      _
    // Predicated region
    $region10: #{tpu_custom_call.1} parent=1 // pred_check
      _
    $region11: #{tpu_custom_call.1} parent=1 // pred_check_branch
      %34 = sbr.rel (0) target = $region13
    $region12: #{tpu_custom_call.1} parent=1 // pred_region
      %s36 = ssub.s32 3072, 3072
      %37 = vsyncadd [#allocation6], %s36
      %s38 = sshll.u32 [#allocation5], 4
      %s39 = int_to_ptr.vmem [resolvable:$true] %s38
      %44 = dma.hbm_to_vmem [thread:$0]  %s2, 3072, %s39, [#allocation6], 192, 192, 12
    $region13: #{tpu_custom_call.1} parent=1 // pred_fallthru
      _
    // Predicated region
    $region14: #{tpu_custom_call.1} parent=1 // pred_check
      _
    $region15: #{tpu_custom_call.1} parent=1 // pred_check_branch
      %46 = sbr.rel (0) target = $region17
    $region16: #{tpu_custom_call.1} parent=1 // pred_region
      _
    $region17: #{tpu_custom_call.1} parent=1 // pred_fallthru
      _
    // Predicated region
    $region18: #{tpu_custom_call.1} parent=1 // pred_check
      _
    $region19: #{tpu_custom_call.1} parent=1 // pred_check_branch
      %48 = sbr.rel (0) target = $region21
    $region20: #{tpu_custom_call.1} parent=1 // pred_region
      _
    $region21: #{tpu_custom_call.1} parent=1 // pred_fallthru
      _
    // Predicated region
    $region22: #{tpu_custom_call.1} parent=1 // pred_check
      _
    $region23: #{tpu_custom_call.1} parent=1 // pred_check_branch
      %50 = sbr.rel (0) target = $region25
    $region24: #{tpu_custom_call.1} parent=1 // pred_region
      _
    $region25: #{tpu_custom_call.1} parent=1 // pred_fallthru
      _
    // Predicated region
    $region26: #{tpu_custom_call.1} parent=1 // pred_check
      _
    $region27: #{tpu_custom_call.1} parent=1 // pred_check_branch
      %52 = sbr.rel (0) target = $region29
    $region28: #{tpu_custom_call.1} parent=1 // pred_region
      _
    $region29: #{tpu_custom_call.1} parent=1 // pred_fallthru
      _
    // Predicated region
    $region30: #{tpu_custom_call.1} parent=1 // pred_check
      _
    $region31: #{tpu_custom_call.1} parent=1 // pred_check_branch
      %54 = sbr.rel (0) target = $region33
    $region32: #{tpu_custom_call.1} parent=1 // pred_region
      _
    $region33: #{tpu_custom_call.1} parent=1 // pred_fallthru
      _
    // Predicated region
    $region34: #{tpu_custom_call.1} parent=1 // pred_check
      _
    $region35: #{tpu_custom_call.1} parent=1 // pred_check_branch
      %56 = sbr.rel (0) target = $region37
    $region36: #{tpu_custom_call.1} parent=1 // pred_region
      _
    $region37: #{tpu_custom_call.1} parent=1 // pred_fallthru
      _
    // Predicated region
    $region38: #{tpu_custom_call.1} parent=1 // pred_check
      _
    $region39: #{tpu_custom_call.1} parent=1 // pred_check_branch
      %58 = sbr.rel (0) target = $region41
    $region40: #{tpu_custom_call.1} parent=1 // pred_region
      _
    $region41: #{tpu_custom_call.1} parent=1 // pred_fallthru
      _
    // Predicated region
    $region42: #{tpu_custom_call.1} parent=1 // pred_check
      _
    $region43: #{tpu_custom_call.1} parent=1 // pred_check_branch
      %60 = sbr.rel (0) target = $region45
    $region44: #{tpu_custom_call.1} parent=1 // pred_region
      _
    $region45: #{tpu_custom_call.1} parent=1 // pred_fallthru
      _
    // Predicated region
    $region46: #{tpu_custom_call.1} parent=1 // pred_check
      _
    $region47: #{tpu_custom_call.1} parent=1 // pred_check_branch
      %62 = sbr.rel (0) target = $region49
    $region48: #{tpu_custom_call.1} parent=1 // pred_region
      %63 = dma.done [#allocation3], 256
    $region49: #{tpu_custom_call.1} parent=1 // pred_fallthru
      _
    // Predicated region
    $region50: #{tpu_custom_call.1} parent=1 // pred_check
      _
    $region51: #{tpu_custom_call.1} parent=1 // pred_check_branch
      %65 = sbr.rel (0) target = $region53
    $region52: #{tpu_custom_call.1} parent=1 // pred_region
      %66 = dma.done [#allocation6], 3072
    $region53: #{tpu_custom_call.1} parent=1 // pred_fallthru
      _
    %v68 = vlaneseq
    %v69 = vshrl.u32 %v68, 7
    %v70 = vadd.s32 %v69, 8
    %v71 = vadd.s32 %v69, 16
    %v72 = vadd.s32 %v69, 24
    %vm73 = vcmp.lt.s32.totalorder %v69, 0
    %v74 = vsub.s32 0, %v69
    %v75 = vsel %vm73, %v74, %v69
    %v76 = vshrl.u32 %v75, 4
    %v77 = vand.u32 %v75, 15
    %v78 = vsub.s32 0, %v77
    %v79 = vsel %vm73, %v78, %v77
    %vm80 = vcmp.lt.s32.totalorder %v70, 0
    %v81 = vsub.s32 0, %v70
    %v82 = vsel %vm80, %v81, %v70
    %v83 = vshrl.u32 %v82, 4
    %v84 = vand.u32 %v82, 15
    %v85 = vsub.s32 0, %v84
    %v86 = vsel %vm80, %v85, %v84
    %vm87 = vcmp.lt.s32.totalorder %v71, 0
    %v88 = vsub.s32 0, %v71
    %v89 = vsel %vm87, %v88, %v71
    %v90 = vshrl.u32 %v89, 4
    %v91 = vand.u32 %v89, 15
    %v92 = vsub.s32 0, %v91
    %v93 = vsel %vm87, %v92, %v91
    %vm94 = vcmp.lt.s32.totalorder %v72, 0
    %v95 = vsub.s32 0, %v72
    %v96 = vsel %vm94, %v95, %v72
    %v97 = vshrl.u32 %v96, 4
    %v98 = vand.u32 %v96, 15
    %v99 = vsub.s32 0, %v98
    %v100 = vsel %vm94, %v99, %v98
    %vm101 = vcmp.ne.s32.totalorder %v79, 0
    %vm102 = vcmp.ne.s32.totalorder %v86, 0
    %vm103 = vcmp.ne.s32.totalorder %v93, 0
    %vm104 = vcmp.ne.s32.totalorder %v100, 0
    %vm105 = vcmp.lt.s32.totalorder %v79, 0
    %vm106 = vcmp.lt.s32.totalorder %v86, 0
    %vm107 = vcmp.lt.s32.totalorder %v93, 0
    %vm108 = vcmp.lt.s32.totalorder %v100, 0
    %vm109 = vmand %vm105, %vm101
    %vm110 = vmand %vm106, %vm102
    %vm111 = vmand %vm107, %vm103
    %vm112 = vmand %vm108, %vm104
    %v113 = vadd.s32 %v79, 16
    %v114 = vadd.s32 %v86, 16
    %v115 = vadd.s32 %v93, 16
    %v116 = vadd.s32 %v100, 16
    %v117 = vsel %vm109, %v113, %v79
    %v118 = vsel %vm110, %v114, %v86
    %v119 = vsel %vm111, %v115, %v93
    %v120 = vsel %vm112, %v116, %v100
    %vm121 = vcmp.ne.s32.totalorder %v117, 0
    %vm122 = vcmp.ne.s32.totalorder %v118, 0
    %vm123 = vcmp.ne.s32.totalorder %v119, 0
    %vm124 = vcmp.ne.s32.totalorder %v120, 0
    %v125 = vsel %vm121, 1, 0
    %v126 = vsel %vm122, 1, 0
    %v127 = vsel %vm123, 1, 0
    %v128 = vsel %vm124, 1, 0
    %v129 = vcvt.s32.f32 %v125
    %v130 = vcvt.s32.f32 %v126
    %v131 = vcvt.s32.f32 %v127
    %v132 = vcvt.s32.f32 %v128
    %vm133 = vcmp.ne.s32.totalorder %v117, 15
    %vm134 = vcmp.ne.s32.totalorder %v118, 15
    %vm135 = vcmp.ne.s32.totalorder %v119, 15
    %vm136 = vcmp.ne.s32.totalorder %v120, 15
    %v137 = vsel %vm133, 1, 0
    %v138 = vsel %vm134, 1, 0
    %v139 = vsel %vm135, 1, 0
    %v140 = vsel %vm136, 1, 0
    %v141 = vcvt.s32.f32 %v137
    %v142 = vcvt.s32.f32 %v138
    %v143 = vcvt.s32.f32 %v139
    %v144 = vcvt.s32.f32 %v140
    %v145 = vld [vmem:[#allocation2] sm:$0xf]
    %v146 = vld [vmem:[#allocation2 + $0x4] sm:$0xf]
    %v147 = vld [vmem:[#allocation2 + $0x8] sm:$0xf]
    %v148 = vld [vmem:[#allocation2 + $0xc] sm:$0xf]
    %v149 = vld [vmem:[%s1] sm:$0xff]
    %v150 = vld [vmem:[%s1 + $0x8] sm:$0xff]
    %v151 = vld [vmem:[%s1 + $0x10] sm:$0xff]
    %v152 = vld [vmem:[%s1 + $0x18] sm:$0xff]
    %v153 = vld [vmem:[%s1 + $0x20] sm:$0xff]
    %v154 = vld [vmem:[%s1 + $0x28] sm:$0xff]
    %v155 = vld [vmem:[%s1 + $0x30] sm:$0xff]
    %v156 = vld [vmem:[%s1 + $0x38] sm:$0xff]
    %v157 = vld [vmem:[%s1 + $0x40] sm:$0xff]
    %v158 = vld [vmem:[%s1 + $0x48] sm:$0xff]
    %v159 = vld [vmem:[%s1 + $0x50] sm:$0xff]
    %v160 = vld [vmem:[%s1 + $0x58] sm:$0xff]
    %v161 = vld [vmem:[%s1 + $0x60] sm:$0xff]
    %v162 = vld [vmem:[%s1 + $0x68] sm:$0xff]
    %v163 = vld [vmem:[%s1 + $0x70] sm:$0xff]
    %v164 = vld [vmem:[%s1 + $0x78] sm:$0xff]
    %v169 = vunpack.c.l.b16 %v145
    %v170 = vunpack.c.l.b16 %v146
    %v171 = vunpack.c.l.b16 %v147
    %v172 = vunpack.c.l.b16 %v148
    %v173 = vpack.c.b16 %v170, %v169
    %v174 = vpack.c.b16 %v172, %v171
    %v191 = vunpack.c.l.b16 %v149
    %v192 = vunpack.c.h.b16 %v149
    %v193 = vunpack.c.l.b16 %v150
    %v194 = vunpack.c.h.b16 %v150
    %v195 = vunpack.c.l.b16 %v151
    %v196 = vunpack.c.h.b16 %v151
    %v197 = vunpack.c.l.b16 %v152
    %v198 = vunpack.c.h.b16 %v152
    %v199 = vunpack.c.l.b16 %v153
    %v200 = vunpack.c.h.b16 %v153
    %v201 = vunpack.c.l.b16 %v154
    %v202 = vunpack.c.h.b16 %v154
    %v203 = vunpack.c.l.b16 %v155
    %v204 = vunpack.c.h.b16 %v155
    %v205 = vunpack.c.l.b16 %v156
    %v206 = vunpack.c.h.b16 %v156
    %v207 = vunpack.c.l.b16 %v157
    %v208 = vunpack.c.h.b16 %v157
    %v209 = vunpack.c.l.b16 %v158
    %v210 = vunpack.c.h.b16 %v158
    %v211 = vunpack.c.l.b16 %v159
    %v212 = vunpack.c.h.b16 %v159
    %v213 = vunpack.c.l.b16 %v160
    %v214 = vunpack.c.h.b16 %v160
    %v215 = vunpack.c.l.b16 %v161
    %v216 = vunpack.c.h.b16 %v161
    %v217 = vunpack.c.l.b16 %v162
    %v218 = vunpack.c.h.b16 %v162
    %v219 = vunpack.c.l.b16 %v163
    %v220 = vunpack.c.h.b16 %v163
    %v221 = vunpack.c.l.b16 %v164
    %v222 = vunpack.c.h.b16 %v164
    %v223 = vpack.c.b16 %v195, %v191
    %v224 = vpack.c.b16 %v196, %v192
    %v225 = vpack.c.b16 %v197, %v193
    %v226 = vpack.c.b16 %v198, %v194
    %v227 = vpack.c.b16 %v203, %v199
    %v228 = vpack.c.b16 %v204, %v200
    %v229 = vpack.c.b16 %v205, %v201
    %v230 = vpack.c.b16 %v206, %v202
    %v231 = vpack.c.b16 %v211, %v207
    %v232 = vpack.c.b16 %v212, %v208
    %v233 = vpack.c.b16 %v213, %v209
    %v234 = vpack.c.b16 %v214, %v210
    %v235 = vpack.c.b16 %v219, %v215
    %v236 = vpack.c.b16 %v220, %v216
    %v237 = vpack.c.b16 %v221, %v217
    %v238 = vpack.c.b16 %v222, %v218
    %vm255 = vcmask 523264
    %v257 = vsel %vm255, %v173, 0
    %v260 = vsel %vm255, %v174, 0
    %262 = vmatprep.subr.bf16.mxu0 %v224
    %263 = vmatpush1.bf16.msra.mxu0 %v223
    %264 = vmatprep.subr.bf16.mxu0 %v228
    %265 = vmatpush1.bf16.msra.mxu0 %v227
    %266 = vmatprep.subr.bf16.mxu0 %v232
    %267 = vmatpush1.bf16.msra.mxu0 %v231
    %268 = vmatprep.subr.bf16.mxu0 %v236
    %269 = vmatpush1.bf16.msra.mxu0 %v235
    %270 = vmatprep.subr.bf16.mxu0 0
    %271 = vmatpush1.bf16.msra.mxu0 0
    %272 = vmatprep.subr.bf16.mxu0 0
    %273 = vmatpush1.bf16.msra.mxu0 0
    %274 = vmatprep.subr.bf16.mxu0 0
    %275 = vmatpush1.bf16.msra.mxu0 0
    %276 = vmatprep.subr.bf16.mxu0 0
    %277 = vmatpush1.bf16.msra.mxu0 0
    %278 = vmatprep.subr.bf16.mxu0 0
    %279 = vmatpush1.bf16.msra.mxu0 0
    %280 = vmatprep.subr.bf16.mxu0 0
    %281 = vmatpush1.bf16.msra.mxu0 0
    %282 = vmatprep.subr.bf16.mxu0 0
    %283 = vmatpush1.bf16.msra.mxu0 0
    %284 = vmatprep.subr.bf16.mxu0 0
    %285 = vmatpush1.bf16.msra.mxu0 0
    %286 = vmatprep.subr.bf16.mxu0 0
    %287 = vmatpush1.bf16.msra.mxu0 0
    %288 = vmatprep.subr.bf16.mxu0 0
    %289 = vmatpush1.bf16.msra.mxu0 0
    %290 = vmatprep.subr.bf16.mxu0 0
    %291 = vmatpush1.bf16.msra.mxu0 0
    %292 = vmatprep.subr.bf16.mxu0 0
    %293 = vmatpush1.bf16.msra.mxu0 0
    %294 = vmatprep.mubr.bf16.mxu0 0
    %295 = vmatmul.mubr.bf16.gmra.mrb[0].mxu0 %v257
    %v296 = vpop.f32.mrb[0].mxu0
    %v297 = vadd.f32 0.0, %v296
    %v298 = vpop.f32.mrb[0].mxu0
    %v299 = vadd.f32 0.0, %v298
    %v300 = vpop.f32.mrb[0].mxu0
    %v301 = vadd.f32 0.0, %v300
    %v302 = vpop.f32.mrb[0].mxu0
    %v303 = vadd.f32 0.0, %v302
    %304 = vmatprep.mubr.bf16.mxu0 0
    %305 = vmatmul.mubr.bf16.gmra.mrb[0].mxu0 %v260
    %v306 = vpop.f32.mrb[0].mxu0
    %v307 = vadd.f32 0.0, %v306
    %v308 = vpop.f32.mrb[0].mxu0
    %v309 = vadd.f32 0.0, %v308
    %v310 = vpop.f32.mrb[0].mxu0
    %v311 = vadd.f32 0.0, %v310
    %v312 = vpop.f32.mrb[0].mxu0
    %v313 = vadd.f32 0.0, %v312
    %314 = vdwg.mxu0
    %315 = vmatprep.subr.bf16.mxu0 %v226
    %316 = vmatpush1.bf16.msra.mxu0 %v225
    %317 = vmatprep.subr.bf16.mxu0 %v230
    %318 = vmatpush1.bf16.msra.mxu0 %v229
    %319 = vmatprep.subr.bf16.mxu0 %v234
    %320 = vmatpush1.bf16.msra.mxu0 %v233
    %321 = vmatprep.subr.bf16.mxu0 %v238
    %322 = vmatpush1.bf16.msra.mxu0 %v237
    %323 = vmatprep.subr.bf16.mxu0 0
    %324 = vmatpush1.bf16.msra.mxu0 0
    %325 = vmatprep.subr.bf16.mxu0 0
    %326 = vmatpush1.bf16.msra.mxu0 0
    %327 = vmatprep.subr.bf16.mxu0 0
    %328 = vmatpush1.bf16.msra.mxu0 0
    %329 = vmatprep.subr.bf16.mxu0 0
    %330 = vmatpush1.bf16.msra.mxu0 0
    %331 = vmatprep.subr.bf16.mxu0 0
    %332 = vmatpush1.bf16.msra.mxu0 0
    %333 = vmatprep.subr.bf16.mxu0 0
    %334 = vmatpush1.bf16.msra.mxu0 0
    %335 = vmatprep.subr.bf16.mxu0 0
    %336 = vmatpush1.bf16.msra.mxu0 0
    %337 = vmatprep.subr.bf16.mxu0 0
    %338 = vmatpush1.bf16.msra.mxu0 0
    %339 = vmatprep.subr.bf16.mxu0 0
    %340 = vmatpush1.bf16.msra.mxu0 0
    %341 = vmatprep.subr.bf16.mxu0 0
    %342 = vmatpush1.bf16.msra.mxu0 0
    %343 = vmatprep.subr.bf16.mxu0 0
    %344 = vmatpush1.bf16.msra.mxu0 0
    %345 = vmatprep.subr.bf16.mxu0 0
    %346 = vmatpush1.bf16.msra.mxu0 0
    %347 = vmatprep.mubr.bf16.mxu0 0
    %348 = vmatmul.mubr.bf16.gmra.mrb[0].mxu0 %v257
    %v349 = vpop.f32.mrb[0].mxu0
    %v350 = vadd.f32 0.0, %v349
    %v351 = vpop.f32.mrb[0].mxu0
    %v352 = vadd.f32 0.0, %v351
    %v353 = vpop.f32.mrb[0].mxu0
    %v354 = vadd.f32 0.0, %v353
    %v355 = vpop.f32.mrb[0].mxu0
    %v356 = vadd.f32 0.0, %v355
    %357 = vmatprep.mubr.bf16.mxu0 0
    %358 = vmatmul.mubr.bf16.gmra.mrb[0].mxu0 %v260
    %v359 = vpop.f32.mrb[0].mxu0
    %v360 = vadd.f32 0.0, %v359
    %v361 = vpop.f32.mrb[0].mxu0
    %v362 = vadd.f32 0.0, %v361
    %v363 = vpop.f32.mrb[0].mxu0
    %v364 = vadd.f32 0.0, %v363
    %v365 = vpop.f32.mrb[0].mxu0
    %v366 = vadd.f32 0.0, %v365
    %367 = vdwg.mxu0
    %v368 = vrot.slane %v297, 7
    %v369 = vrot.slane %v301, 7
    %v370 = vrot.slane %v307, 7
    %v371 = vrot.slane %v311, 7
    %vm372 = vcmp.lt.s32.totalorder %v69, 1
    %v373 = vsel %vm372, %v370, %v371
    %v374 = vsel %vm372, %v369, %v370
    %v375 = vsel %vm372, %v368, %v369
    %v376 = vsel %vm372, %v371, %v368
    %v377 = vmul.f32 %v129, %v376
    %v378 = vmul.f32 %v130, %v375
    %v379 = vmul.f32 %v131, %v374
    %v380 = vmul.f32 %v132, %v373
    %v381 = vrot.slane %v350, 1
    %v382 = vrot.slane %v354, 1
    %v383 = vrot.slane %v360, 1
    %v384 = vrot.slane %v364, 1
    %vm385 = vcmp.lt.s32.totalorder %v69, 7
    %v386 = vsel %vm385, %v383, %v384
    %v387 = vsel %vm385, %v382, %v383
    %v388 = vsel %vm385, %v381, %v382
    %v389 = vsel %vm385, %v384, %v381
    %v390 = vmul.f32 %v141, %v388
    %v391 = vmul.f32 %v142, %v387
    %v392 = vmul.f32 %v143, %v386
    %v393 = vmul.f32 %v144, %v389
    %v394 = vadd.f32 %v299, %v377
    %v395 = vadd.f32 %v303, %v378
    %v396 = vadd.f32 %v309, %v379
    %v397 = vadd.f32 %v313, %v380
    %v398 = vadd.f32 %v394, %v390
    %v399 = vadd.f32 %v395, %v391
    %v400 = vadd.f32 %v396, %v392
    %v401 = vadd.f32 %v397, %v393
    %v402 = vadd.f32 %v398, %v399
    %v403 = vadd.f32 %v402, %v400
    %v404 = vadd.f32 %v403, %v401
    %v405 = vrot.slane %v404, 4
    %v406 = vadd.f32 %v404, %v405
    %v407 = vrot.slane %v406, 2
    %v408 = vadd.f32 %v406, %v407
    %v409 = vrot.slane %v408, 1
    %v410 = vadd.f32 %v408, %v409
    %v411 = vmul.f32 %v398, %v398
    %v412 = vmul.f32 %v399, %v399
    %v413 = vmul.f32 %v400, %v400
    %v414 = vmul.f32 %v401, %v401
    %v415 = vadd.f32 %v411, %v412
    %v416 = vadd.f32 %v415, %v413
    %v417 = vadd.f32 %v416, %v414
    %v418 = vrot.slane %v417, 4
    %v419 = vadd.f32 %v417, %v418
    %v420 = vrot.slane %v419, 2
    %v421 = vadd.f32 %v419, %v420
    %v422 = vrot.slane %v421, 1
    %v423 = vadd.f32 %v421, %v422
    %vm424 = vcmp.eq.s32.totalorder %v69, 0
    %v425 = vsel %vm424, %v410, %v423
    %v426 = vld [vmem:[%s3] sm:$0xff]
    %v427 = vld [vmem:[%s3 + $0x8] sm:$0xff]
    %v428 = vld [vmem:[%s3 + $0x10] sm:$0xff]
    %v429 = vld [vmem:[%s3 + $0x18] sm:$0xff]
    %v430 = vld [vmem:[%s3 + $0x20] sm:$0xff]
    %v431 = vld [vmem:[%s3 + $0x28] sm:$0xff]
    %v432 = vld [vmem:[%s3 + $0x30] sm:$0xff]
    %v433 = vld [vmem:[%s3 + $0x38] sm:$0xff]
    %v434 = vld [vmem:[%s3 + $0x40] sm:$0xff]
    %v435 = vld [vmem:[%s3 + $0x48] sm:$0xff]
    %v436 = vld [vmem:[%s3 + $0x50] sm:$0xff]
    %v437 = vld [vmem:[%s3 + $0x58] sm:$0xff]
    %v438 = vld [vmem:[%s3 + $0x60] sm:$0xff]
    %v439 = vld [vmem:[%s3 + $0x68] sm:$0xff]
    %v440 = vld [vmem:[%s3 + $0x70] sm:$0xff]
    %v441 = vld [vmem:[%s3 + $0x78] sm:$0xff]
    %442 = vmatprep.subr.mxu0 0.0
    %443 = vmatpush1.msra.mxu0 %v426
    %444 = vmatprep.subr.mxu0 0.0
    %445 = vmatpush1.msra.mxu0 %v427
    %446 = vmatprep.subr.mxu0 0.0
    %447 = vmatpush1.msra.mxu0 %v428
    %448 = vmatprep.subr.mxu0 0.0
    %449 = vmatpush1.msra.mxu0 %v429
    %450 = vmatprep.subr.mxu0 0.0
    %451 = vmatpush1.msra.mxu0 %v430
    %452 = vmatprep.subr.mxu0 0.0
    %453 = vmatpush1.msra.mxu0 %v431
    %454 = vmatprep.subr.mxu0 0.0
    %455 = vmatpush1.msra.mxu0 %v432
    %456 = vmatprep.subr.mxu0 0.0
    %457 = vmatpush1.msra.mxu0 %v433
    %458 = vmatprep.subr.mxu0 0.0
    %459 = vmatpush1.msra.mxu0 %v434
    %460 = vmatprep.subr.mxu0 0.0
    %461 = vmatpush1.msra.mxu0 %v435
    %462 = vmatprep.subr.mxu0 0.0
    %463 = vmatpush1.msra.mxu0 %v436
    %464 = vmatprep.subr.mxu0 0.0
    %465 = vmatpush1.msra.mxu0 %v437
    %466 = vmatprep.subr.mxu0 0.0
    %467 = vmatpush1.msra.mxu0 %v438
    %468 = vmatprep.subr.mxu0 0.0
    %469 = vmatpush1.msra.mxu0 %v439
    %470 = vmatprep.subr.mxu0 0.0
    %471 = vmatpush1.msra.mxu0 %v440
    %472 = vmatprep.subr.mxu0 0.0
    %473 = vmatpush1.msra.mxu0 %v441
    %474 = vmatprep.subr.mxu0 0.0
    %475 = vmatpush1.msra.mxu0 0.0
    %476 = vmatprep.subr.mxu0 0.0
    %477 = vmatpush1.msra.mxu0 0.0
    %478 = vmatprep.subr.mxu0 0.0
    %479 = vmatpush1.msra.mxu0 0.0
    %480 = vmatprep.subr.mxu0 0.0
    %481 = vmatpush1.msra.mxu0 0.0
    %482 = vmatprep.subr.mxu0 0.0
    %483 = vmatpush1.msra.mxu0 0.0
    %484 = vmatprep.subr.mxu0 0.0
    %485 = vmatpush1.msra.mxu0 0.0
    %486 = vmatprep.subr.mxu0 0.0
    %487 = vmatpush1.msra.mxu0 0.0
    %488 = vmatprep.subr.mxu0 0.0
    %489 = vmatpush1.msra.mxu0 0.0
    %490 = vmatprep.subr.mxu0 0.0
    %491 = vmatpush1.msra.mxu0 0.0
    %492 = vmatprep.subr.mxu0 0.0
    %493 = vmatpush1.msra.mxu0 0.0
    %494 = vmatprep.subr.mxu0 0.0
    %495 = vmatpush1.msra.mxu0 0.0
    %496 = vmatprep.subr.mxu0 0.0
    %497 = vmatpush1.msra.mxu0 0.0
    %498 = vmatprep.subr.mxu0 0.0
    %499 = vmatpush1.msra.mxu0 0.0
    %500 = vmatprep.subr.mxu0 0.0
    %501 = vmatpush1.msra.mxu0 0.0
    %502 = vmatprep.subr.mxu0 0.0
    %503 = vmatpush1.msra.mxu0 0.0
    %504 = vmatprep.subr.mxu0 0.0
    %505 = vmatpush1.msra.mxu0 0.0
    %506 = vmatprep.mubr.f32.mxu0 0.0
    %507 = vmatmul.mubr.f32.gmra.mrb[0].mxu0 %v425
    %v508 = vpop.f32.mrb[0].mxu0
    %v509 = vadd.f32 0.0, %v508
    %v510 = vpop.f32.mrb[0].mxu0
    %511 = vdwg.mxu0
    %v512 = vmul.f32 %v509, 0.001953125
    %v513 = vmul.f32 %v512, %v512
    %v515 = vrot.slane %v513, 7
    %v517 = vsub.f32 %v512, %v515
    %v518 = vmax.f32 %v517, 0.0
    %v519 = vld [vmem:[%s5] sm:$0x1]
    %v520 = vadd.f32 %v518, 1e-05
    %v521 = vrsqrt.pop %v520
    %v524 = vunpack.c.l.s4 1966171168
    %v525 = vunpack.c.0.s8 %v524
    %v526 = vlaneseq
    %v527 = vshrl.u32 %v526, 7
    %v528 = vsub.s32 %v525, %v527
    %v529 = vrot.slane %v521, %v528
    %v530 = vcombine.high %v529, %v529
    %v532 = vunpack.c.l.s4 1966171168
    %v533 = vunpack.c.0.s8 %v532
    %v534 = vlaneseq
    %v535 = vshrl.u32 %v534, 7
    %v536 = vsub.s32 %v533, %v535
    %v537 = vrot.slane %v530, %v536
    %v539 = vmul.f32 %v519, %v537
    %v540 = vld [vmem:[%s6] sm:$0x1]
    %v541 = vmul.f32 %v512, %v539
    %v542 = vsub.f32 %v540, %v541
    %v544 = vlaneseq
    %v545 = vshrl.u32 %v544, 7
    %v546 = vsub.s32 0, %v545
    %v547 = vrot.slane %v539, %v546
    %v550 = vlaneseq
    %v551 = vshrl.u32 %v550, 7
    %v552 = vsub.s32 0, %v551
    %v553 = vrot.slane %v542, %v552
    %v555 = vsel %vm424, %v547, %v553
    %v556 = vld [vmem:[%s4] sm:$0xff]
    %vm557 = vcmask 64512
    %v559 = vsel %vm557, %v555, 0
    %561 = vmatprep.subr.mxu0 0.0
    %562 = vmatpush1.msra.mxu0 %v556
    %563 = vmatprep.subr.mxu0 0.0
    %564 = vmatpush1.msra.mxu0 0.0
    %565 = vmatprep.subr.mxu0 0.0
    %566 = vmatpush1.msra.mxu0 0.0
    %567 = vmatprep.subr.mxu0 0.0
    %568 = vmatpush1.msra.mxu0 0.0
    %569 = vmatprep.subr.mxu0 0.0
    %570 = vmatpush1.msra.mxu0 0.0
    %571 = vmatprep.subr.mxu0 0.0
    %572 = vmatpush1.msra.mxu0 0.0
    %573 = vmatprep.subr.mxu0 0.0
    %574 = vmatpush1.msra.mxu0 0.0
    %575 = vmatprep.subr.mxu0 0.0
    %576 = vmatpush1.msra.mxu0 0.0
    %577 = vmatprep.subr.mxu0 0.0
    %578 = vmatpush1.msra.mxu0 0.0
    %579 = vmatprep.subr.mxu0 0.0
    %580 = vmatpush1.msra.mxu0 0.0
    %581 = vmatprep.subr.mxu0 0.0
    %582 = vmatpush1.msra.mxu0 0.0
    %583 = vmatprep.subr.mxu0 0.0
    %584 = vmatpush1.msra.mxu0 0.0
    %585 = vmatprep.subr.mxu0 0.0
    %586 = vmatpush1.msra.mxu0 0.0
    %587 = vmatprep.subr.mxu0 0.0
    %588 = vmatpush1.msra.mxu0 0.0
    %589 = vmatprep.subr.mxu0 0.0
    %590 = vmatpush1.msra.mxu0 0.0
    %591 = vmatprep.subr.mxu0 0.0
    %592 = vmatpush1.msra.mxu0 0.0
    %593 = vmatprep.subr.mxu0 0.0
    %594 = vmatpush1.msra.mxu0 0.0
    %595 = vmatprep.subr.mxu0 0.0
    %596 = vmatpush1.msra.mxu0 0.0
    %597 = vmatprep.subr.mxu0 0.0
    %598 = vmatpush1.msra.mxu0 0.0
    %599 = vmatprep.subr.mxu0 0.0
    %600 = vmatpush1.msra.mxu0 0.0
    %601 = vmatprep.subr.mxu0 0.0
    %602 = vmatpush1.msra.mxu0 0.0
    %603 = vmatprep.subr.mxu0 0.0
    %604 = vmatpush1.msra.mxu0 0.0
    %605 = vmatprep.subr.mxu0 0.0
    %606 = vmatpush1.msra.mxu0 0.0
    %607 = vmatprep.subr.mxu0 0.0
    %608 = vmatpush1.msra.mxu0 0.0
    %609 = vmatprep.subr.mxu0 0.0
    %610 = vmatpush1.msra.mxu0 0.0
    %611 = vmatprep.subr.mxu0 0.0
    %612 = vmatpush1.msra.mxu0 0.0
    %613 = vmatprep.subr.mxu0 0.0
    %614 = vmatpush1.msra.mxu0 0.0
    %615 = vmatprep.subr.mxu0 0.0
    %616 = vmatpush1.msra.mxu0 0.0
    %617 = vmatprep.subr.mxu0 0.0
    %618 = vmatpush1.msra.mxu0 0.0
    %619 = vmatprep.subr.mxu0 0.0
    %620 = vmatpush1.msra.mxu0 0.0
    %621 = vmatprep.subr.mxu0 0.0
    %622 = vmatpush1.msra.mxu0 0.0
    %623 = vmatprep.subr.mxu0 0.0
    %624 = vmatpush1.msra.mxu0 0.0
    %625 = vmatprep.mubr.f32.mxu0 0.0
    %626 = vmatmul.mubr.f32.gmra.mrb[0].mxu0 %v559
    %v627 = vpop.f32.mrb[0].mxu0
    %v628 = vadd.f32 0.0, %v627
    %v629 = vpop.f32.mrb[0].mxu0
    %630 = vdwg.mxu0
    %v631 = vlaneseq
    %v632 = vshrl.u32 %v631, 7
    %v633 = vsub.s32 0, %v632
    %v634 = vrot.slane %v628, %v633
    %v635 = vmul.f32 %v398, %v634
    %v636 = vmul.f32 %v399, %v634
    %v637 = vmul.f32 %v400, %v634
    %v638 = vmul.f32 %v401, %v634
    %v639 = vlaneseq
    %v640 = vshrl.u32 %v639, 7
    %v641 = vsub.s32 1, %v640
    %v642 = vrot.slane %v628, %v641
    %v643 = vadd.f32 %v635, %v642
    %v644 = vadd.f32 %v636, %v642
    %v645 = vadd.f32 %v637, %v642
    %v646 = vadd.f32 %v638, %v642
    %v647 = vmax.f32 %v643, 0.0
    %v648 = vmax.f32 %v644, 0.0
    %v649 = vmax.f32 %v645, 0.0
    %v650 = vmax.f32 %v646, 0.0
    %v651 = vpack.c.bf16 %v648, %v647
    %v652 = vpack.c.bf16 %v650, %v649
    %v653 = vld [vmem:[#allocation5] sm:$0xff]
    %v654 = vld [vmem:[#allocation5 + $0x8] sm:$0xf]
    %v655 = vld [vmem:[#allocation5 + $0xc] sm:$0xff]
    %v656 = vld [vmem:[#allocation5 + $0x14] sm:$0xf]
    %v657 = vld [vmem:[#allocation5 + $0x18] sm:$0xff]
    %v658 = vld [vmem:[#allocation5 + $0x20] sm:$0xf]
    %v659 = vld [vmem:[#allocation5 + $0x24] sm:$0xff]
    %v660 = vld [vmem:[#allocation5 + $0x2c] sm:$0xf]
    %v661 = vld [vmem:[#allocation5 + $0x30] sm:$0xff]
    %v662 = vld [vmem:[#allocation5 + $0x38] sm:$0xf]
    %v663 = vld [vmem:[#allocation5 + $0x3c] sm:$0xff]
    %v664 = vld [vmem:[#allocation5 + $0x44] sm:$0xf]
    %v665 = vld [vmem:[#allocation5 + $0x48] sm:$0xff]
    %v666 = vld [vmem:[#allocation5 + $0x50] sm:$0xf]
    %v667 = vld [vmem:[#allocation5 + $0x54] sm:$0xff]
    %v668 = vld [vmem:[#allocation5 + $0x5c] sm:$0xf]
    %v669 = vld [vmem:[#allocation5 + $0x60] sm:$0xff]
    %v670 = vld [vmem:[#allocation5 + $0x68] sm:$0xf]
    %v671 = vld [vmem:[#allocation5 + $0x6c] sm:$0xff]
    %v672 = vld [vmem:[#allocation5 + $0x74] sm:$0xf]
    %v673 = vld [vmem:[#allocation5 + $0x78] sm:$0xff]
    %v674 = vld [vmem:[#allocation5 + $0x80] sm:$0xf]
    %v675 = vld [vmem:[#allocation5 + $0x84] sm:$0xff]
    %v676 = vld [vmem:[#allocation5 + $0x8c] sm:$0xf]
    %v677 = vld [vmem:[#allocation5 + $0x90] sm:$0xff]
    %v678 = vld [vmem:[#allocation5 + $0x98] sm:$0xf]
    %v679 = vld [vmem:[#allocation5 + $0x9c] sm:$0xff]
    %v680 = vld [vmem:[#allocation5 + $0xa4] sm:$0xf]
    %v681 = vld [vmem:[#allocation5 + $0xa8] sm:$0xff]
    %v682 = vld [vmem:[#allocation5 + $0xb0] sm:$0xf]
    %v683 = vld [vmem:[#allocation5 + $0xb4] sm:$0xff]
    %v684 = vld [vmem:[#allocation5 + $0xbc] sm:$0xf]
    %v717 = vunpack.c.l.b16 %v653
    %v718 = vunpack.c.h.b16 %v653
    %v719 = vunpack.c.l.b16 %v654
    %v720 = vunpack.c.l.b16 %v655
    %v721 = vunpack.c.h.b16 %v655
    %v722 = vunpack.c.l.b16 %v656
    %v723 = vunpack.c.l.b16 %v657
    %v724 = vunpack.c.h.b16 %v657
    %v725 = vunpack.c.l.b16 %v658
    %v726 = vunpack.c.l.b16 %v659
    %v727 = vunpack.c.h.b16 %v659
    %v728 = vunpack.c.l.b16 %v660
    %v729 = vunpack.c.l.b16 %v661
    %v730 = vunpack.c.h.b16 %v661
    %v731 = vunpack.c.l.b16 %v662
    %v732 = vunpack.c.l.b16 %v663
    %v733 = vunpack.c.h.b16 %v663
    %v734 = vunpack.c.l.b16 %v664
    %v735 = vunpack.c.l.b16 %v665
    %v736 = vunpack.c.h.b16 %v665
    %v737 = vunpack.c.l.b16 %v666
    %v738 = vunpack.c.l.b16 %v667
    %v739 = vunpack.c.h.b16 %v667
    %v740 = vunpack.c.l.b16 %v668
    %v741 = vunpack.c.l.b16 %v669
    %v742 = vunpack.c.h.b16 %v669
    %v743 = vunpack.c.l.b16 %v670
    %v744 = vunpack.c.l.b16 %v671
    %v745 = vunpack.c.h.b16 %v671
    %v746 = vunpack.c.l.b16 %v672
    %v747 = vunpack.c.l.b16 %v673
    %v748 = vunpack.c.h.b16 %v673
    %v749 = vunpack.c.l.b16 %v674
    %v750 = vunpack.c.l.b16 %v675
    %v751 = vunpack.c.h.b16 %v675
    %v752 = vunpack.c.l.b16 %v676
    %v753 = vunpack.c.l.b16 %v677
    %v754 = vunpack.c.h.b16 %v677
    %v755 = vunpack.c.l.b16 %v678
    %v756 = vunpack.c.l.b16 %v679
    %v757 = vunpack.c.h.b16 %v679
    %v758 = vunpack.c.l.b16 %v680
    %v759 = vunpack.c.l.b16 %v681
    %v760 = vunpack.c.h.b16 %v681
    %v761 = vunpack.c.l.b16 %v682
    %v762 = vunpack.c.l.b16 %v683
    %v763 = vunpack.c.h.b16 %v683
    %v764 = vunpack.c.l.b16 %v684
    %v765 = vpack.c.b16 %v720, %v717
    %v766 = vpack.c.b16 %v721, %v718
    %v767 = vpack.c.b16 %v722, %v719
    %v768 = vpack.c.b16 %v726, %v723
    %v769 = vpack.c.b16 %v727, %v724
    %v770 = vpack.c.b16 %v728, %v725
    %v771 = vpack.c.b16 %v732, %v729
    %v772 = vpack.c.b16 %v733, %v730
    %v773 = vpack.c.b16 %v734, %v731
    %v774 = vpack.c.b16 %v738, %v735
    %v775 = vpack.c.b16 %v739, %v736
    %v776 = vpack.c.b16 %v740, %v737
    %v777 = vpack.c.b16 %v744, %v741
    %v778 = vpack.c.b16 %v745, %v742
    %v779 = vpack.c.b16 %v746, %v743
    %v780 = vpack.c.b16 %v750, %v747
    %v781 = vpack.c.b16 %v751, %v748
    %v782 = vpack.c.b16 %v752, %v749
    %v783 = vpack.c.b16 %v756, %v753
    %v784 = vpack.c.b16 %v757, %v754
    %v785 = vpack.c.b16 %v758, %v755
    %v786 = vpack.c.b16 %v762, %v759
    %v787 = vpack.c.b16 %v763, %v760
    %v788 = vpack.c.b16 %v764, %v761
    %813 = vmatprep.subr.bf16.mxu0 %v766
    %814 = vmatpush1.bf16.msra.mxu0 %v765
    %815 = vmatprep.subr.bf16.mxu0 %v769
    %816 = vmatpush1.bf16.msra.mxu0 %v768
    %817 = vmatprep.subr.bf16.mxu0 %v772
    %818 = vmatpush1.bf16.msra.mxu0 %v771
    %819 = vmatprep.subr.bf16.mxu0 %v775
    %820 = vmatpush1.bf16.msra.mxu0 %v774
    %821 = vmatprep.subr.bf16.mxu0 %v778
    %822 = vmatpush1.bf16.msra.mxu0 %v777
    %823 = vmatprep.subr.bf16.mxu0 %v781
    %824 = vmatpush1.bf16.msra.mxu0 %v780
    %825 = vmatprep.subr.bf16.mxu0 %v784
    %826 = vmatpush1.bf16.msra.mxu0 %v783
    %827 = vmatprep.subr.bf16.mxu0 %v787
    %828 = vmatpush1.bf16.msra.mxu0 %v786
    %829 = vmatprep.subr.bf16.mxu0 0
    %830 = vmatpush1.bf16.msra.mxu0 0
    %831 = vmatprep.subr.bf16.mxu0 0
    %832 = vmatpush1.bf16.msra.mxu0 0
    %833 = vmatprep.subr.bf16.mxu0 0
    %834 = vmatpush1.bf16.msra.mxu0 0
    %835 = vmatprep.subr.bf16.mxu0 0
    %836 = vmatpush1.bf16.msra.mxu0 0
    %837 = vmatprep.subr.bf16.mxu0 0
    %838 = vmatpush1.bf16.msra.mxu0 0
    %839 = vmatprep.subr.bf16.mxu0 0
    %840 = vmatpush1.bf16.msra.mxu0 0
    %841 = vmatprep.subr.bf16.mxu0 0
    %842 = vmatpush1.bf16.msra.mxu0 0
    %843 = vmatprep.subr.bf16.mxu0 0
    %844 = vmatpush1.bf16.msra.mxu0 0
    %845 = vmatprep.mubr.bf16.mxu0 0
    %846 = vmatmul.mubr.bf16.gmra.mrb[0].mxu0 %v651
    %v847 = vpop.f32.mrb[0].mxu0
    %v848 = vadd.f32 0.0, %v847
    %v849 = vpop.f32.mrb[0].mxu0
    %v850 = vadd.f32 0.0, %v849
    %v851 = vpop.f32.mrb[0].mxu0
    %v852 = vadd.f32 0.0, %v851
    %v853 = vpop.f32.mrb[0].mxu0
    %v854 = vadd.f32 0.0, %v853
    %855 = vmatprep.mubr.bf16.mxu0 0
    %856 = vmatmul.mubr.bf16.gmra.mrb[0].mxu0 %v652
    %v857 = vpop.f32.mrb[0].mxu0
    %v858 = vadd.f32 0.0, %v857
    %v859 = vpop.f32.mrb[0].mxu0
    %v860 = vadd.f32 0.0, %v859
    %v861 = vpop.f32.mrb[0].mxu0
    %v862 = vadd.f32 0.0, %v861
    %v863 = vpop.f32.mrb[0].mxu0
    %v864 = vadd.f32 0.0, %v863
    %865 = vdwg.mxu0
    %866 = vmatprep.subr.bf16.mxu0 0
    %867 = vmatpush1.bf16.msra.mxu0 %v767
    %868 = vmatprep.subr.bf16.mxu0 0
    %869 = vmatpush1.bf16.msra.mxu0 %v770
    %870 = vmatprep.subr.bf16.mxu0 0
    %871 = vmatpush1.bf16.msra.mxu0 %v773
    %872 = vmatprep.subr.bf16.mxu0 0
    %873 = vmatpush1.bf16.msra.mxu0 %v776
    %874 = vmatprep.subr.bf16.mxu0 0
    %875 = vmatpush1.bf16.msra.mxu0 %v779
    %876 = vmatprep.subr.bf16.mxu0 0
    %877 = vmatpush1.bf16.msra.mxu0 %v782
    %878 = vmatprep.subr.bf16.mxu0 0
    %879 = vmatpush1.bf16.msra.mxu0 %v785
    %880 = vmatprep.subr.bf16.mxu0 0
    %881 = vmatpush1.bf16.msra.mxu0 %v788
    %882 = vmatprep.subr.bf16.mxu0 0
    %883 = vmatpush1.bf16.msra.mxu0 0
    %884 = vmatprep.subr.bf16.mxu0 0
    %885 = vmatpush1.bf16.msra.mxu0 0
    %886 = vmatprep.subr.bf16.mxu0 0
    %887 = vmatpush1.bf16.msra.mxu0 0
    %888 = vmatprep.subr.bf16.mxu0 0
    %889 = vmatpush1.bf16.msra.mxu0 0
    %890 = vmatprep.subr.bf16.mxu0 0
    %891 = vmatpush1.bf16.msra.mxu0 0
    %892 = vmatprep.subr.bf16.mxu0 0
    %893 = vmatpush1.bf16.msra.mxu0 0
    %894 = vmatprep.subr.bf16.mxu0 0
    %895 = vmatpush1.bf16.msra.mxu0 0
    %896 = vmatprep.subr.bf16.mxu0 0
    %897 = vmatpush1.bf16.msra.mxu0 0
    %898 = vmatprep.mubr.bf16.mxu0 0
    %899 = vmatmul.mubr.bf16.gmra.mrb[0].mxu0 %v651
    %v900 = vpop.f32.mrb[0].mxu0
    %v901 = vadd.f32 0.0, %v900
    %v902 = vpop.f32.mrb[0].mxu0
    %v903 = vpop.f32.mrb[0].mxu0
    %v904 = vadd.f32 0.0, %v903
    %v905 = vpop.f32.mrb[0].mxu0
    %906 = vmatprep.mubr.bf16.mxu0 0
    %907 = vmatmul.mubr.bf16.gmra.mrb[0].mxu0 %v652
    %v908 = vpop.f32.mrb[0].mxu0
    %v909 = vadd.f32 0.0, %v908
    %v910 = vpop.f32.mrb[0].mxu0
    %v911 = vpop.f32.mrb[0].mxu0
    %v912 = vadd.f32 0.0, %v911
    %v913 = vpop.f32.mrb[0].mxu0
    %914 = vdwg.mxu0
    %v915 = vrot.slane %v848, 7
    %v916 = vrot.slane %v852, 7
    %v917 = vrot.slane %v858, 7
    %v918 = vrot.slane %v862, 7
    %v919 = vsel %vm372, %v917, %v918
    %v920 = vsel %vm372, %v916, %v917
    %v921 = vsel %vm372, %v915, %v916
    %v922 = vsel %vm372, %v918, %v915
    %v923 = vmul.f32 %v129, %v922
    %v924 = vmul.f32 %v130, %v921
    %v925 = vmul.f32 %v131, %v920
    %v926 = vmul.f32 %v132, %v919
    %v927 = vrot.slane %v901, 1
    %v928 = vrot.slane %v904, 1
    %v929 = vrot.slane %v909, 1
    %v930 = vrot.slane %v912, 1
    %v931 = vsel %vm385, %v929, %v930
    %v932 = vsel %vm385, %v928, %v929
    %v933 = vsel %vm385, %v927, %v928
    %v934 = vsel %vm385, %v930, %v927
    %v935 = vmul.f32 %v141, %v933
    %v936 = vmul.f32 %v142, %v932
    %v937 = vmul.f32 %v143, %v931
    %v938 = vmul.f32 %v144, %v934
    %v939 = vadd.f32 %v850, %v923
    %v940 = vadd.f32 %v854, %v924
    %v941 = vadd.f32 %v860, %v925
    %v942 = vadd.f32 %v864, %v926
    %v943 = vadd.f32 %v939, %v935
    %v944 = vadd.f32 %v940, %v936
    %v945 = vadd.f32 %v941, %v937
    %v946 = vadd.f32 %v942, %v938
    %v947 = vadd.f32 %v943, %v944
    %v948 = vadd.f32 %v947, %v945
    %v949 = vadd.f32 %v948, %v946
    %v950 = vrot.slane %v949, 4
    %v951 = vadd.f32 %v949, %v950
    %v952 = vrot.slane %v951, 2
    %v953 = vadd.f32 %v951, %v952
    %v954 = vrot.slane %v953, 1
    %v955 = vadd.f32 %v953, %v954
    %v956 = vmul.f32 %v943, %v943
    %v957 = vmul.f32 %v944, %v944
    %v958 = vmul.f32 %v945, %v945
    %v959 = vmul.f32 %v946, %v946
    %v960 = vadd.f32 %v956, %v957
    %v961 = vadd.f32 %v960, %v958
    %v962 = vadd.f32 %v961, %v959
    %v963 = vrot.slane %v962, 4
    %v964 = vadd.f32 %v962, %v963
    %v965 = vrot.slane %v964, 2
    %v966 = vadd.f32 %v964, %v965
    %v967 = vrot.slane %v966, 1
    %v968 = vadd.f32 %v966, %v967
    %v969 = vsel %vm424, %v955, %v968
    %970 = vmatprep.subr.mxu0 0.0
    %971 = vmatpush1.msra.mxu0 %v426
    %972 = vmatprep.subr.mxu0 0.0
    %973 = vmatpush1.msra.mxu0 %v427
    %974 = vmatprep.subr.mxu0 0.0
    %975 = vmatpush1.msra.mxu0 %v428
    %976 = vmatprep.subr.mxu0 0.0
    %977 = vmatpush1.msra.mxu0 %v429
    %978 = vmatprep.subr.mxu0 0.0
    %979 = vmatpush1.msra.mxu0 %v430
    %980 = vmatprep.subr.mxu0 0.0
    %981 = vmatpush1.msra.mxu0 %v431
    %982 = vmatprep.subr.mxu0 0.0
    %983 = vmatpush1.msra.mxu0 %v432
    %984 = vmatprep.subr.mxu0 0.0
    %985 = vmatpush1.msra.mxu0 %v433
    %986 = vmatprep.subr.mxu0 0.0
    %987 = vmatpush1.msra.mxu0 %v434
    %988 = vmatprep.subr.mxu0 0.0
    %989 = vmatpush1.msra.mxu0 %v435
    %990 = vmatprep.subr.mxu0 0.0
    %991 = vmatpush1.msra.mxu0 %v436
    %992 = vmatprep.subr.mxu0 0.0
    %993 = vmatpush1.msra.mxu0 %v437
    %994 = vmatprep.subr.mxu0 0.0
    %995 = vmatpush1.msra.mxu0 %v438
    %996 = vmatprep.subr.mxu0 0.0
    %997 = vmatpush1.msra.mxu0 %v439
    %998 = vmatprep.subr.mxu0 0.0
    %999 = vmatpush1.msra.mxu0 %v440
    %1000 = vmatprep.subr.mxu0 0.0
    %1001 = vmatpush1.msra.mxu0 %v441
    %1002 = vmatprep.subr.mxu0 0.0
    %1003 = vmatpush1.msra.mxu0 0.0
    %1004 = vmatprep.subr.mxu0 0.0
    %1005 = vmatpush1.msra.mxu0 0.0
    %1006 = vmatprep.subr.mxu0 0.0
    %1007 = vmatpush1.msra.mxu0 0.0
    %1008 = vmatprep.subr.mxu0 0.0
    %1009 = vmatpush1.msra.mxu0 0.0
    %1010 = vmatprep.subr.mxu0 0.0
    %1011 = vmatpush1.msra.mxu0 0.0
    %1012 = vmatprep.subr.mxu0 0.0
    %1013 = vmatpush1.msra.mxu0 0.0
    %1014 = vmatprep.subr.mxu0 0.0
    %1015 = vmatpush1.msra.mxu0 0.0
    %1016 = vmatprep.subr.mxu0 0.0
    %1017 = vmatpush1.msra.mxu0 0.0
    %1018 = vmatprep.subr.mxu0 0.0
    %1019 = vmatpush1.msra.mxu0 0.0
    %1020 = vmatprep.subr.mxu0 0.0
    %1021 = vmatpush1.msra.mxu0 0.0
    %1022 = vmatprep.subr.mxu0 0.0
    %1023 = vmatpush1.msra.mxu0 0.0
    %1024 = vmatprep.subr.mxu0 0.0
    %1025 = vmatpush1.msra.mxu0 0.0
    %1026 = vmatprep.subr.mxu0 0.0
    %1027 = vmatpush1.msra.mxu0 0.0
    %1028 = vmatprep.subr.mxu0 0.0
    %1029 = vmatpush1.msra.mxu0 0.0
    %1030 = vmatprep.subr.mxu0 0.0
    %1031 = vmatpush1.msra.mxu0 0.0
    %1032 = vmatprep.subr.mxu0 0.0
    %1033 = vmatpush1.msra.mxu0 0.0
    %1034 = vmatprep.mubr.f32.mxu0 0.0
    %1035 = vmatmul.mubr.f32.gmra.mrb[0].mxu0 %v969
    %v1036 = vpop.f32.mrb[0].mxu0
    %v1037 = vadd.f32 0.0, %v1036
    %v1038 = vpop.f32.mrb[0].mxu0
    %1039 = vdwg.mxu0
    %v1040 = vmul.f32 %v1037, 0.001953125
    %v1041 = vmul.f32 %v1040, %v1040
    %v1043 = vrot.slane %v1041, 7
    %v1045 = vsub.f32 %v1040, %v1043
    %v1046 = vmax.f32 %v1045, 0.0
    %v1047 = vld [vmem:[%s7] sm:$0x1]
    %v1048 = vadd.f32 %v1046, 1e-05
    %v1049 = vrsqrt.pop %v1048
    %v1052 = vunpack.c.l.s4 1966171168
    %v1053 = vunpack.c.0.s8 %v1052
    %v1054 = vlaneseq
    %v1055 = vshrl.u32 %v1054, 7
    %v1056 = vsub.s32 %v1053, %v1055
    %v1057 = vrot.slane %v1049, %v1056
    %v1058 = vcombine.high %v1057, %v1057
    %v1060 = vunpack.c.l.s4 1966171168
    %v1061 = vunpack.c.0.s8 %v1060
    %v1062 = vlaneseq
    %v1063 = vshrl.u32 %v1062, 7
    %v1064 = vsub.s32 %v1061, %v1063
    %v1065 = vrot.slane %v1058, %v1064
    %v1067 = vmul.f32 %v1047, %v1065
    %v1068 = vld [vmem:[%s8] sm:$0x1]
    %v1069 = vmul.f32 %v1040, %v1067
    %v1070 = vsub.f32 %v1068, %v1069
    %v1072 = vlaneseq
    %v1073 = vshrl.u32 %v1072, 7
    %v1074 = vsub.s32 0, %v1073
    %v1075 = vrot.slane %v1067, %v1074
    %v1078 = vlaneseq
    %v1079 = vshrl.u32 %v1078, 7
    %v1080 = vsub.s32 0, %v1079
    %v1081 = vrot.slane %v1070, %v1080
    %v1083 = vsel %vm424, %v1075, %v1081
    %v1085 = vsel %vm557, %v1083, 0
    %1087 = vmatprep.subr.mxu0 0.0
    %1088 = vmatpush1.msra.mxu0 %v556
    %1089 = vmatprep.subr.mxu0 0.0
    %1090 = vmatpush1.msra.mxu0 0.0
    %1091 = vmatprep.subr.mxu0 0.0
    %1092 = vmatpush1.msra.mxu0 0.0
    %1093 = vmatprep.subr.mxu0 0.0
    %1094 = vmatpush1.msra.mxu0 0.0
    %1095 = vmatprep.subr.mxu0 0.0
    %1096 = vmatpush1.msra.mxu0 0.0
    %1097 = vmatprep.subr.mxu0 0.0
    %1098 = vmatpush1.msra.mxu0 0.0
    %1099 = vmatprep.subr.mxu0 0.0
    %1100 = vmatpush1.msra.mxu0 0.0
    %1101 = vmatprep.subr.mxu0 0.0
    %1102 = vmatpush1.msra.mxu0 0.0
    %1103 = vmatprep.subr.mxu0 0.0
    %1104 = vmatpush1.msra.mxu0 0.0
    %1105 = vmatprep.subr.mxu0 0.0
    %1106 = vmatpush1.msra.mxu0 0.0
    %1107 = vmatprep.subr.mxu0 0.0
    %1108 = vmatpush1.msra.mxu0 0.0
    %1109 = vmatprep.subr.mxu0 0.0
    %1110 = vmatpush1.msra.mxu0 0.0
    %1111 = vmatprep.subr.mxu0 0.0
    %1112 = vmatpush1.msra.mxu0 0.0
    %1113 = vmatprep.subr.mxu0 0.0
    %1114 = vmatpush1.msra.mxu0 0.0
    %1115 = vmatprep.subr.mxu0 0.0
    %1116 = vmatpush1.msra.mxu0 0.0
    %1117 = vmatprep.subr.mxu0 0.0
    %1118 = vmatpush1.msra.mxu0 0.0
    %1119 = vmatprep.subr.mxu0 0.0
    %1120 = vmatpush1.msra.mxu0 0.0
    %1121 = vmatprep.subr.mxu0 0.0
    %1122 = vmatpush1.msra.mxu0 0.0
    %1123 = vmatprep.subr.mxu0 0.0
    %1124 = vmatpush1.msra.mxu0 0.0
    %1125 = vmatprep.subr.mxu0 0.0
    %1126 = vmatpush1.msra.mxu0 0.0
    %1127 = vmatprep.subr.mxu0 0.0
    %1128 = vmatpush1.msra.mxu0 0.0
    %1129 = vmatprep.subr.mxu0 0.0
    %1130 = vmatpush1.msra.mxu0 0.0
    %1131 = vmatprep.subr.mxu0 0.0
    %1132 = vmatpush1.msra.mxu0 0.0
    %1133 = vmatprep.subr.mxu0 0.0
    %1134 = vmatpush1.msra.mxu0 0.0
    %1135 = vmatprep.subr.mxu0 0.0
    %1136 = vmatpush1.msra.mxu0 0.0
    %1137 = vmatprep.subr.mxu0 0.0
    %1138 = vmatpush1.msra.mxu0 0.0
    %1139 = vmatprep.subr.mxu0 0.0
    %1140 = vmatpush1.msra.mxu0 0.0
    %1141 = vmatprep.subr.mxu0 0.0
    %1142 = vmatpush1.msra.mxu0 0.0
    %1143 = vmatprep.subr.mxu0 0.0
    %1144 = vmatpush1.msra.mxu0 0.0
    %1145 = vmatprep.subr.mxu0 0.0
    %1146 = vmatpush1.msra.mxu0 0.0
    %1147 = vmatprep.subr.mxu0 0.0
    %1148 = vmatpush1.msra.mxu0 0.0
    %1149 = vmatprep.subr.mxu0 0.0
    %1150 = vmatpush1.msra.mxu0 0.0
    %1151 = vmatprep.mubr.f32.mxu0 0.0
    %1152 = vmatmul.mubr.f32.gmra.mrb[0].mxu0 %v1085
    %v1153 = vpop.f32.mrb[0].mxu0
    %v1154 = vadd.f32 0.0, %v1153
    %v1155 = vpop.f32.mrb[0].mxu0
    %1156 = vdwg.mxu0
    %v1157 = vlaneseq
    %v1158 = vshrl.u32 %v1157, 7
    %v1159 = vsub.s32 0, %v1158
    %v1160 = vrot.slane %v1154, %v1159
    %v1161 = vmul.f32 %v943, %v1160
    %v1162 = vmul.f32 %v944, %v1160
    %v1163 = vmul.f32 %v945, %v1160
    %v1164 = vmul.f32 %v946, %v1160
    %v1165 = vlaneseq
    %v1166 = vshrl.u32 %v1165, 7
    %v1167 = vsub.s32 1, %v1166
    %v1168 = vrot.slane %v1154, %v1167
    %v1169 = vadd.f32 %v1161, %v1168
    %v1170 = vadd.f32 %v1162, %v1168
    %v1171 = vadd.f32 %v1163, %v1168
    %v1172 = vadd.f32 %v1164, %v1168
    %v1173 = vadd.f32 %v352, %v356
    %v1174 = vadd.f32 %v1173, %v362
    %v1175 = vadd.f32 %v1174, %v366
    %v1176 = vrot.slane %v1175, 4
    %v1177 = vadd.f32 %v1175, %v1176
    %v1178 = vrot.slane %v1177, 2
    %v1179 = vadd.f32 %v1177, %v1178
    %v1180 = vrot.slane %v1179, 1
    %v1181 = vadd.f32 %v1179, %v1180
    %v1182 = vmul.f32 %v352, %v352
    %v1183 = vmul.f32 %v356, %v356
    %v1184 = vmul.f32 %v362, %v362
    %v1185 = vmul.f32 %v366, %v366
    %v1186 = vadd.f32 %v1182, %v1183
    %v1187 = vadd.f32 %v1186, %v1184
    %v1188 = vadd.f32 %v1187, %v1185
    %v1189 = vrot.slane %v1188, 4
    %v1190 = vadd.f32 %v1188, %v1189
    %v1191 = vrot.slane %v1190, 2
    %v1192 = vadd.f32 %v1190, %v1191
    %v1193 = vrot.slane %v1192, 1
    %v1194 = vadd.f32 %v1192, %v1193
    %v1195 = vsel %vm424, %v1181, %v1194
    %1196 = vmatprep.subr.mxu0 0.0
    %1197 = vmatpush1.msra.mxu0 %v426
    %1198 = vmatprep.subr.mxu0 0.0
    %1199 = vmatpush1.msra.mxu0 %v427
    %1200 = vmatprep.subr.mxu0 0.0
    %1201 = vmatpush1.msra.mxu0 %v428
    %1202 = vmatprep.subr.mxu0 0.0
    %1203 = vmatpush1.msra.mxu0 %v429
    %1204 = vmatprep.subr.mxu0 0.0
    %1205 = vmatpush1.msra.mxu0 %v430
    %1206 = vmatprep.subr.mxu0 0.0
    %1207 = vmatpush1.msra.mxu0 %v431
    %1208 = vmatprep.subr.mxu0 0.0
    %1209 = vmatpush1.msra.mxu0 %v432
    %1210 = vmatprep.subr.mxu0 0.0
    %1211 = vmatpush1.msra.mxu0 %v433
    %1212 = vmatprep.subr.mxu0 0.0
    %1213 = vmatpush1.msra.mxu0 %v434
    %1214 = vmatprep.subr.mxu0 0.0
    %1215 = vmatpush1.msra.mxu0 %v435
    %1216 = vmatprep.subr.mxu0 0.0
    %1217 = vmatpush1.msra.mxu0 %v436
    %1218 = vmatprep.subr.mxu0 0.0
    %1219 = vmatpush1.msra.mxu0 %v437
    %1220 = vmatprep.subr.mxu0 0.0
    %1221 = vmatpush1.msra.mxu0 %v438
    %1222 = vmatprep.subr.mxu0 0.0
    %1223 = vmatpush1.msra.mxu0 %v439
    %1224 = vmatprep.subr.mxu0 0.0
    %1225 = vmatpush1.msra.mxu0 %v440
    %1226 = vmatprep.subr.mxu0 0.0
    %1227 = vmatpush1.msra.mxu0 %v441
    %1228 = vmatprep.subr.mxu0 0.0
    %1229 = vmatpush1.msra.mxu0 0.0
    %1230 = vmatprep.subr.mxu0 0.0
    %1231 = vmatpush1.msra.mxu0 0.0
    %1232 = vmatprep.subr.mxu0 0.0
    %1233 = vmatpush1.msra.mxu0 0.0
    %1234 = vmatprep.subr.mxu0 0.0
    %1235 = vmatpush1.msra.mxu0 0.0
    %1236 = vmatprep.subr.mxu0 0.0
    %1237 = vmatpush1.msra.mxu0 0.0
    %1238 = vmatprep.subr.mxu0 0.0
    %1239 = vmatpush1.msra.mxu0 0.0
    %1240 = vmatprep.subr.mxu0 0.0
    %1241 = vmatpush1.msra.mxu0 0.0
    %1242 = vmatprep.subr.mxu0 0.0
    %1243 = vmatpush1.msra.mxu0 0.0
    %1244 = vmatprep.subr.mxu0 0.0
    %1245 = vmatpush1.msra.mxu0 0.0
    %1246 = vmatprep.subr.mxu0 0.0
    %1247 = vmatpush1.msra.mxu0 0.0
    %1248 = vmatprep.subr.mxu0 0.0
    %1249 = vmatpush1.msra.mxu0 0.0
    %1250 = vmatprep.subr.mxu0 0.0
    %1251 = vmatpush1.msra.mxu0 0.0
    %1252 = vmatprep.subr.mxu0 0.0
    %1253 = vmatpush1.msra.mxu0 0.0
    %1254 = vmatprep.subr.mxu0 0.0
    %1255 = vmatpush1.msra.mxu0 0.0
    %1256 = vmatprep.subr.mxu0 0.0
    %1257 = vmatpush1.msra.mxu0 0.0
    %1258 = vmatprep.subr.mxu0 0.0
    %1259 = vmatpush1.msra.mxu0 0.0
    %1260 = vmatprep.mubr.f32.mxu0 0.0
    %1261 = vmatmul.mubr.f32.gmra.mrb[0].mxu0 %v1195
    %v1262 = vpop.f32.mrb[0].mxu0
    %v1263 = vadd.f32 0.0, %v1262
    %v1264 = vpop.f32.mrb[0].mxu0
    %1265 = vdwg.mxu0
    %v1266 = vmul.f32 %v1263, 0.001953125
    %v1267 = vmul.f32 %v1266, %v1266
    %v1269 = vrot.slane %v1267, 7
    %v1271 = vsub.f32 %v1266, %v1269
    %v1272 = vmax.f32 %v1271, 0.0
    %v1273 = vld [vmem:[%s9] sm:$0x1]
    %v1274 = vadd.f32 %v1272, 1e-05
    %v1275 = vrsqrt.pop %v1274
    %v1278 = vunpack.c.l.s4 1966171168
    %v1279 = vunpack.c.0.s8 %v1278
    %v1280 = vlaneseq
    %v1281 = vshrl.u32 %v1280, 7
    %v1282 = vsub.s32 %v1279, %v1281
    %v1283 = vrot.slane %v1275, %v1282
    %v1284 = vcombine.high %v1283, %v1283
    %v1286 = vunpack.c.l.s4 1966171168
    %v1287 = vunpack.c.0.s8 %v1286
    %v1288 = vlaneseq
    %v1289 = vshrl.u32 %v1288, 7
    %v1290 = vsub.s32 %v1287, %v1289
    %v1291 = vrot.slane %v1284, %v1290
    %v1293 = vmul.f32 %v1273, %v1291
    %v1294 = vld [vmem:[%s10] sm:$0x1]
    %v1295 = vmul.f32 %v1266, %v1293
    %v1296 = vsub.f32 %v1294, %v1295
    %v1298 = vlaneseq
    %v1299 = vshrl.u32 %v1298, 7
    %v1300 = vsub.s32 0, %v1299
    %v1301 = vrot.slane %v1293, %v1300
    %v1304 = vlaneseq
    %v1305 = vshrl.u32 %v1304, 7
    %v1306 = vsub.s32 0, %v1305
    %v1307 = vrot.slane %v1296, %v1306
    %v1309 = vsel %vm424, %v1301, %v1307
    %v1311 = vsel %vm557, %v1309, 0
    %1313 = vmatprep.subr.mxu0 0.0
    %1314 = vmatpush1.msra.mxu0 %v556
    %1315 = vmatprep.subr.mxu0 0.0
    %1316 = vmatpush1.msra.mxu0 0.0
    %1317 = vmatprep.subr.mxu0 0.0
    %1318 = vmatpush1.msra.mxu0 0.0
    %1319 = vmatprep.subr.mxu0 0.0
    %1320 = vmatpush1.msra.mxu0 0.0
    %1321 = vmatprep.subr.mxu0 0.0
    %1322 = vmatpush1.msra.mxu0 0.0
    %1323 = vmatprep.subr.mxu0 0.0
    %1324 = vmatpush1.msra.mxu0 0.0
    %1325 = vmatprep.subr.mxu0 0.0
    %1326 = vmatpush1.msra.mxu0 0.0
    %1327 = vmatprep.subr.mxu0 0.0
    %1328 = vmatpush1.msra.mxu0 0.0
    %1329 = vmatprep.subr.mxu0 0.0
    %1330 = vmatpush1.msra.mxu0 0.0
    %1331 = vmatprep.subr.mxu0 0.0
    %1332 = vmatpush1.msra.mxu0 0.0
    %1333 = vmatprep.subr.mxu0 0.0
    %1334 = vmatpush1.msra.mxu0 0.0
    %1335 = vmatprep.subr.mxu0 0.0
    %1336 = vmatpush1.msra.mxu0 0.0
    %1337 = vmatprep.subr.mxu0 0.0
    %1338 = vmatpush1.msra.mxu0 0.0
    %1339 = vmatprep.subr.mxu0 0.0
    %1340 = vmatpush1.msra.mxu0 0.0
    %1341 = vmatprep.subr.mxu0 0.0
    %1342 = vmatpush1.msra.mxu0 0.0
    %1343 = vmatprep.subr.mxu0 0.0
    %1344 = vmatpush1.msra.mxu0 0.0
    %1345 = vmatprep.subr.mxu0 0.0
    %1346 = vmatpush1.msra.mxu0 0.0
    %1347 = vmatprep.subr.mxu0 0.0
    %1348 = vmatpush1.msra.mxu0 0.0
    %1349 = vmatprep.subr.mxu0 0.0
    %1350 = vmatpush1.msra.mxu0 0.0
    %1351 = vmatprep.subr.mxu0 0.0
    %1352 = vmatpush1.msra.mxu0 0.0
    %1353 = vmatprep.subr.mxu0 0.0
    %1354 = vmatpush1.msra.mxu0 0.0
    %1355 = vmatprep.subr.mxu0 0.0
    %1356 = vmatpush1.msra.mxu0 0.0
    %1357 = vmatprep.subr.mxu0 0.0
    %1358 = vmatpush1.msra.mxu0 0.0
    %1359 = vmatprep.subr.mxu0 0.0
    %1360 = vmatpush1.msra.mxu0 0.0
    %1361 = vmatprep.subr.mxu0 0.0
    %1362 = vmatpush1.msra.mxu0 0.0
    %1363 = vmatprep.subr.mxu0 0.0
    %1364 = vmatpush1.msra.mxu0 0.0
    %1365 = vmatprep.subr.mxu0 0.0
    %1366 = vmatpush1.msra.mxu0 0.0
    %1367 = vmatprep.subr.mxu0 0.0
    %1368 = vmatpush1.msra.mxu0 0.0
    %1369 = vmatprep.subr.mxu0 0.0
    %1370 = vmatpush1.msra.mxu0 0.0
    %1371 = vmatprep.subr.mxu0 0.0
    %1372 = vmatpush1.msra.mxu0 0.0
    %1373 = vmatprep.subr.mxu0 0.0
    %1374 = vmatpush1.msra.mxu0 0.0
    %1375 = vmatprep.subr.mxu0 0.0
    %1376 = vmatpush1.msra.mxu0 0.0
    %1377 = vmatprep.mubr.f32.mxu0 0.0
    %1378 = vmatmul.mubr.f32.gmra.mrb[0].mxu0 %v1311
    %v1379 = vpop.f32.mrb[0].mxu0
    %v1380 = vadd.f32 0.0, %v1379
    %v1381 = vpop.f32.mrb[0].mxu0
    %1382 = vdwg.mxu0
    %v1383 = vlaneseq
    %v1384 = vshrl.u32 %v1383, 7
    %v1385 = vsub.s32 0, %v1384
    %v1386 = vrot.slane %v1380, %v1385
    %v1387 = vmul.f32 %v352, %v1386
    %v1388 = vmul.f32 %v356, %v1386
    %v1389 = vmul.f32 %v362, %v1386
    %v1390 = vmul.f32 %v366, %v1386
    %v1391 = vlaneseq
    %v1392 = vshrl.u32 %v1391, 7
    %v1393 = vsub.s32 1, %v1392
    %v1394 = vrot.slane %v1380, %v1393
    %v1395 = vadd.f32 %v1387, %v1394
    %v1396 = vadd.f32 %v1388, %v1394
    %v1397 = vadd.f32 %v1389, %v1394
    %v1398 = vadd.f32 %v1390, %v1394
    %v1399 = vadd.f32 %v1169, %v1395
    %v1400 = vadd.f32 %v1170, %v1396
    %v1401 = vadd.f32 %v1171, %v1397
    %v1402 = vadd.f32 %v1172, %v1398
    %v1403 = vmax.f32 %v1399, 0.0
    %v1404 = vmax.f32 %v1400, 0.0
    %v1405 = vmax.f32 %v1401, 0.0
    %v1406 = vmax.f32 %v1402, 0.0
    %1407 = vst [vmem:[#allocation7] sm:$0xff] %v1403
    %1408 = vst [vmem:[#allocation7 + $0x8] sm:$0xff] %v1404
    %1409 = vst [vmem:[#allocation7 + $0x10] sm:$0xff] %v1405
    %1410 = vst [vmem:[#allocation7 + $0x18] sm:$0xff] %v1406
    // Predicated region
    $region54: #{tpu_custom_call.1} parent=1 // pred_check
      _
    $region55: #{tpu_custom_call.1} parent=1 // pred_check_branch
      %1412 = sbr.rel (0) target = $region57
    $region56: #{tpu_custom_call.1} parent=1 // pred_region
      %s1414 = ssub.s32 512, 512
      %1415 = vsyncadd [#allocation4], %s1414
      %s1416 = sshll.u32 [#allocation7], 4
      %s1417 = int_to_ptr.vmem [resolvable:$true] %s1416
      %1422 = dma.vmem_to_hbm [thread:$0]  %s1417, 512, %s11, [#allocation4], 128, 128, 8
    $region57: #{tpu_custom_call.1} parent=1 // pred_fallthru
      _
    // Predicated region
    $region58: #{tpu_custom_call.1} parent=1 // pred_check
      _
    $region59: #{tpu_custom_call.1} parent=1 // pred_check_branch
      %1424 = sbr.rel (0) target = $region61
    $region60: #{tpu_custom_call.1} parent=1 // pred_region
      %1425 = dma.done [#allocation4], 512
    $region61: #{tpu_custom_call.1} parent=1 // pred_fallthru
      _
    %1426 = vsyncpa [#allocation3], 1
    %1427 = vsyncpa [#allocation6], 1
    %1428 = vsyncpa [#allocation4], 1

</llo_original>
